<compile_context>
chip_gen: v7x
topology: tpu7x:2x2x1
jax: 0.10.0
libtpu: 0.0.40
codegen_flags: <defaults>
</compile_context>

<pallas_src>
import functools

import jax
import jax.numpy as jnp
from jax.experimental import pallas as pl
from jax.experimental.pallas import tpu as pltpu


def sign_kernel(x_ref, w1_ref, b1_ref, w2_ref, b2_ref, o_ref):
    """One row tile: fused block-diagonal branch matmul + final projection.

    x_ref  : (bn, L*F)   branch inputs concatenated along features
    w1_ref : (L*F, L*H)  block-diagonal first-layer weight
    b1_ref : (1, L*H)    concatenated first-layer bias (f32)
    w2_ref : (L*H, C)    final-layer weight
    b2_ref : (1, C)      final-layer bias (f32)
    o_ref  : (bn, C)     output tile (f32)
    """
    # One MXU dot produces all L branch activations, already "concatenated".
    h = jnp.dot(x_ref[...], w1_ref[...], preferred_element_type=jnp.float32)
    h = jnp.maximum(h + b1_ref[...], 0.0)
    # TODO(synk): dropout (p=0.0 default) is identity at inference; omitted.
    out = jnp.dot(h.astype(w2_ref.dtype), w2_ref[...],
                  preferred_element_type=jnp.float32) + b2_ref[...]
    o_ref[...] = out.astype(o_ref.dtype)


def _round_up(x, m):
    return ((x + m - 1) // m) * m


def sign_mlp_forward(xs, w1, b1, w2, b2, *, block_n=None,
                     compute_dtype=jnp.bfloat16):
    """SIGN_MLP forward (frozen-MLP path).

    xs: list of L arrays, each (N, F)   branch inputs
    w1: (L, F, H)  per-branch Linear weights (transposed vs torch (H, F))
    b1: (L, H)     per-branch Linear biases
    w2: (L, H, C)  final Linear weight split per branch (transposed vs torch)
    b2: (C,)       final Linear bias
    """
    L = len(xs)
    N, F = xs[0].shape
    H = w1.shape[-1]
    C = w2.shape[-1]
    LF, LH = L * F, L * H

    # ---- wrapper-side operand prep (one tiny pass; fused by XLA with casts) ----
    x_cat = jnp.concatenate(xs, axis=-1).astype(compute_dtype)      # (N, L*F)

    # Block-diagonal first-layer weight: w1[l] at block (l*F:(l+1)*F, l*H:(l+1)*H).
    w1_bd = jnp.zeros((LF, LH), dtype=jnp.float32)
    for l in range(L):
        w1_bd = w1_bd.at[l * F:(l + 1) * F, l * H:(l + 1) * H].set(w1[l])
    w1_bd = w1_bd.astype(compute_dtype)
    b1_cat = b1.reshape(1, LH).astype(jnp.float32)   # biases stay f32 (added post-accum)

    w2_cat = w2.reshape(LH, C).astype(compute_dtype)
    b2_row = b2.reshape(1, C).astype(jnp.float32)

    # ---- row tiling ------------------------------------------------------------
    row_align = 8 * (4 // jnp.dtype(compute_dtype).itemsize)   # 8 for f32, 16 for bf16
    if block_n is None:
        block_n = min(512, _round_up(N, row_align))
    block_n = _round_up(block_n, row_align)
    grid = (pl.cdiv(N, block_n),)

    itemsize = jnp.dtype(compute_dtype).itemsize
    cost = pl.CostEstimate(
        flops=2 * N * (LF * LH + LH * C),
        transcendentals=0,
        bytes_accessed=(N * LF * itemsize            # x_cat read
                        + (LF * LH + LH * C) * itemsize + (LH + C) * 4  # weights/biases
                        + N * C * 4))                # output write

    out = pl.pallas_call(
        sign_kernel,
        out_shape=jax.ShapeDtypeStruct((N, C), jnp.float32),
        grid_spec=pltpu.PrefetchScalarGridSpec(
            num_scalar_prefetch=0,
            grid=grid,
            in_specs=[
                pl.BlockSpec((block_n, LF), lambda i: (i, 0)),
                pl.BlockSpec((LF, LH), lambda i: (0, 0)),
                pl.BlockSpec((1, LH), lambda i: (0, 0)),
                pl.BlockSpec((LH, C), lambda i: (0, 0)),
                pl.BlockSpec((1, C), lambda i: (0, 0)),
            ],
            out_specs=pl.BlockSpec((block_n, C), lambda i: (i, 0)),
        ),
        compiler_params=pltpu.CompilerParams(
            dimension_semantics=("parallel",),
            vmem_limit_bytes=48 * 1024 * 1024,   # fits v7x's 64 MiB physical VMEM
        ),
        cost_estimate=cost,
    )(x_cat, w1_bd, b1_cat, w2_cat, b2_row)
    return out


def reference_forward(xs, w1, b1, w2, b2):
    """Pure-JAX f32 reference matching PyTorch SIGN_MLP.forward (mlp_freezed=True)."""
    hs = [jnp.maximum(x @ w1[i] + b1[i], 0.0) for i, x in enumerate(xs)]
    h = jnp.concatenate(hs, axis=-1)
    return h @ w2.reshape(-1, w2.shape[-1]) + b2


if __name__ == "__main__":
    # Module config: in_channels=32, hidden_channels=32, out_channels=16,
    # num_layers=2 -> L = num_layers + 1 = 3 branches; N = 2048 nodes so the
    # grid has 4 row tiles (block_n=512) and the parallel axis is exercised.
    F, H, C = 32, 32, 16
    num_layers = 2
    L = num_layers + 1
    N = 2048

    key = jax.random.PRNGKey(0)
    kx, kw1, kb1, kw2, kb2 = jax.random.split(key, 5)

    # xs: list of L node-feature matrices, each (N, F) (matches forward(xs: List)).
    xs = [jax.random.normal(k, (N, F), dtype=jnp.float32)
          for k in jax.random.split(kx, L)]

    # Per-branch Linear(in=F, out=H): torch stores (H, F); we use transposed (F, H).
    w1 = 0.1 * jax.random.normal(kw1, (L, F, H), dtype=jnp.float32)
    b1 = 0.1 * jax.random.normal(kb1, (L, H), dtype=jnp.float32)

    # Final Linear(in=L*H, out=C): split into per-branch chunks (L, H, C).
    w2 = 0.1 * jax.random.normal(kw2, (L, H, C), dtype=jnp.float32)
    b2 = 0.1 * jax.random.normal(kb2, (C,), dtype=jnp.float32)

    ref = reference_forward(xs, w1, b1, w2, b2)

    # f32 path: tight check of the fused block-diagonal formulation.
    out_f32 = jax.block_until_ready(
        sign_mlp_forward(xs, w1, b1, w2, b2, compute_dtype=jnp.float32))
    assert out_f32.shape == (N, C), out_f32.shape
    assert jnp.allclose(out_f32, ref, atol=1e-4, rtol=1e-4), "f32 mismatch vs reference"

    # bf16 path (default): bf16 MXU operands, f32 accumulation.
    out_bf16 = jax.block_until_ready(sign_mlp_forward(xs, w1, b1, w2, b2))
    assert out_bf16.shape == (N, C), out_bf16.shape
    assert jnp.allclose(out_bf16, ref, atol=5e-2, rtol=5e-2), "bf16 mismatch vs reference"

    print("KERNEL_OK")
</pallas_src>

<mosaic_0001>
module attributes {stable_mosaic.version = 11 : i64} {
  func.func @sign_kernel(%arg0: i32, %arg1: memref<512x96xf32, #tpu.memory_space<vmem>>, %arg2: memref<96x96xf32, #tpu.memory_space<vmem>>, %arg3: memref<1x96xf32, #tpu.memory_space<vmem>>, %arg4: memref<96x16xf32, #tpu.memory_space<vmem>>, %arg5: memref<1x16xf32, #tpu.memory_space<vmem>>, %arg6: memref<512x16xf32, #tpu.memory_space<vmem>>) attributes {dimension_semantics = [#tpu.dimension_semantics<parallel>], iteration_bounds = array<i64: 4>, scalar_prefetch = 0 : i64, scratch_operands = 0 : i64, tpu.core_type = #tpu.core_type<tc>, window_params = [{transform_indices = @transform_0, window_bounds = array<i64: 512, 96>}, {pipeline_mode = #tpu.pipeline_mode<synchronous>, transform_indices = @transform_1, window_bounds = array<i64: 96, 96>}, {pipeline_mode = #tpu.pipeline_mode<synchronous>, transform_indices = @transform_2, window_bounds = array<i64: 1, 96>}, {pipeline_mode = #tpu.pipeline_mode<synchronous>, transform_indices = @transform_3, window_bounds = array<i64: 96, 16>}, {pipeline_mode = #tpu.pipeline_mode<synchronous>, transform_indices = @transform_4, window_bounds = array<i64: 1, 16>}, {transform_indices = @transform_5, window_bounds = array<i64: 512, 16>}]} {
    %c0 = arith.constant 0 : index
    %c0_0 = arith.constant 0 : index
    %0 = vector.load %arg1[%c0, %c0_0] : memref<512x96xf32, #tpu.memory_space<vmem>>, vector<512x96xf32>
    %c0_1 = arith.constant 0 : index
    %c0_2 = arith.constant 0 : index
    %1 = vector.load %arg2[%c0_1, %c0_2] : memref<96x96xf32, #tpu.memory_space<vmem>>, vector<96x96xf32>
    %cst = arith.constant dense<0.000000e+00> : vector<512x96xf32>
    %2 = tpu.matmul %0, %1, %cst {dimension_numbers = #tpu.dot_dimension_numbers<[1], [0], [0], [1], [0, 0, 1, 1], [], []>} : vector<512x96xf32>, vector<96x96xf32>, vector<512x96xf32> -> vector<512x96xf32>
    %c0_3 = arith.constant 0 : index
    %c0_4 = arith.constant 0 : index
    %3 = vector.load %arg3[%c0_3, %c0_4] : memref<1x96xf32, #tpu.memory_space<vmem>>, vector<1x96xf32>
    %4 = vector.broadcast %3 : vector<1x96xf32> to vector<512x96xf32>
    %5 = arith.addf %2, %4 : vector<512x96xf32>
    %cst_5 = arith.constant 0.000000e+00 : f32
    %6 = vector.broadcast %cst_5 : f32 to vector<512x96xf32>
    %7 = arith.maximumf %5, %6 : vector<512x96xf32>
    %c0_6 = arith.constant 0 : index
    %c0_7 = arith.constant 0 : index
    %8 = vector.load %arg4[%c0_6, %c0_7] : memref<96x16xf32, #tpu.memory_space<vmem>>, vector<96x16xf32>
    %cst_8 = arith.constant dense<0.000000e+00> : vector<512x16xf32>
    %9 = tpu.matmul %7, %8, %cst_8 {dimension_numbers = #tpu.dot_dimension_numbers<[1], [0], [0], [1], [0, 0, 1, 1], [], []>} : vector<512x96xf32>, vector<96x16xf32>, vector<512x16xf32> -> vector<512x16xf32>
    %c0_9 = arith.constant 0 : index
    %c0_10 = arith.constant 0 : index
    %10 = vector.load %arg5[%c0_9, %c0_10] : memref<1x16xf32, #tpu.memory_space<vmem>>, vector<1x16xf32>
    %11 = vector.broadcast %10 : vector<1x16xf32> to vector<512x16xf32>
    %12 = arith.addf %9, %11 : vector<512x16xf32>
    %c0_11 = arith.constant 0 : index
    %c0_12 = arith.constant 0 : index
    %13 = vector.load %arg6[%c0_11, %c0_12] : memref<512x16xf32, #tpu.memory_space<vmem>>, vector<512x16xf32>
    tpu.vector_store %arg6[%c0_11, %c0_12], %12 {strides = array<i32>} : memref<512x16xf32, #tpu.memory_space<vmem>>, vector<512x16xf32>,
    return
  }
  func.func @transform_0(%arg0: i32) -> (i32, i32) {
    %c0_i32 = arith.constant 0 : i32
    %c0_i32_0 = arith.constant 0 : i32
    return %arg0, %c0_i32 : i32, i32
  }
  func.func @transform_1(%arg0: i32) -> (i32, i32) {
    %c0_i32 = arith.constant 0 : i32
    %c0_i32_0 = arith.constant 0 : i32
    %c0_i32_1 = arith.constant 0 : i32
    return %c0_i32, %c0_i32_0 : i32, i32
  }
  func.func @transform_2(%arg0: i32) -> (i32, i32) {
    %c0_i32 = arith.constant 0 : i32
    %c0_i32_0 = arith.constant 0 : i32
    %c0_i32_1 = arith.constant 0 : i32
    return %c0_i32, %c0_i32_0 : i32, i32
  }
  func.func @transform_3(%arg0: i32) -> (i32, i32) {
    %c0_i32 = arith.constant 0 : i32
    %c0_i32_0 = arith.constant 0 : i32
    %c0_i32_1 = arith.constant 0 : i32
    return %c0_i32, %c0_i32_0 : i32, i32
  }
  func.func @transform_4(%arg0: i32) -> (i32, i32) {
    %c0_i32 = arith.constant 0 : i32
    %c0_i32_0 = arith.constant 0 : i32
    %c0_i32_1 = arith.constant 0 : i32
    return %c0_i32, %c0_i32_0 : i32, i32
  }
  func.func @transform_5(%arg0: i32) -> (i32, i32) {
    %c0_i32 = arith.constant 0 : i32
    %c0_i32_0 = arith.constant 0 : i32
    return %arg0, %c0_i32 : i32, i32
  }
}

</mosaic_0001>

<llo_original>
// kernel: tpu_custom_call.1
$region0: #{tpu_custom_call.1}
  #allocation0 [shape = 'u32[]', space=smem, size = 0x4, offset = 0x4, fixed_abs, tag = 'smem constant byte address 0x4 - core index']
  #allocation1 [shape = 'u32[144,128]{1,0:T(1,128)}', space=vmem, size = 0x12000, scoped, tag = 'internal scratch']
  %s0 = inlined_call_operand.vmem [shape: f32[2048,96], index: 0, kind: input, shape index: {}]
  %s1 = inlined_call_operand.vmem [shape: f32[96,96], index: 1, kind: input, shape index: {}]
  %s2 = inlined_call_operand.vmem [shape: f32[1,96], index: 2, kind: input, shape index: {}]
  %s3 = inlined_call_operand.vmem [shape: f32[96,16], index: 3, kind: input, shape index: {}]
  %s4 = inlined_call_operand.vmem [shape: f32[1,16], index: 4, kind: input, shape index: {}]
  %s5 = inlined_call_operand.vmem [shape: f32[2048,16], index: 5, kind: output, shape index: {}]
  %s6 = sld [smem:[#allocation0]]
  $region53: #{tpu_custom_call.1} parent=0
    _
  %s8 = ssub.s32 1, %s6
  %s9 = scalar_select 0, %s8, %s6
  loop: start=0, step=1, limit=6
  $region2: #{tpu_custom_call.1} parent=0 // loop_pre_header
    _
  $region3: #{tpu_custom_call.1} parent=0 // loop_header
    %s11 = sphi 0, %s15
    %p12 = scmp.ge.s32.totalorder %s11, 6
    %s21 = sphi 0, %s23
    %s24 = sphi 0, %s21
    %s25 = sphi 0, %s24
    %s41 = sphi 0, %s25
    %s45 = sphi 0, %s45
    %s47 = sphi 0, %s45
    %s48 = sphi 0, %s47
    %s62 = sphi 0, %s48
    %s66 = sphi 0, %s66
    %s68 = sphi 0, %s66
    %s69 = sphi 0, %s68
    %s83 = sphi 0, %s69
    %s87 = sphi 0, %s87
    %s89 = sphi 0, %s87
    %s90 = sphi 0, %s89
    %s104 = sphi 0, %s90
    %s108 = sphi 0, %s108
    %s110 = sphi 0, %s108
    %s111 = sphi 0, %s110
    %s125 = sphi 0, %s111
    %s131 = sphi 0, %s133
    %s134 = sphi 0, %s131
    %s135 = sphi 0, %s134
    %s151 = sphi 0, %s135
  $region4: #{tpu_custom_call.1} parent=0 // loop_header_branch
    %14 = sbr.rel (%p12) target = $region8
  $region5: #{tpu_custom_call.1} parent=0 // loop_body
    %s16 = ssub.s32 %s11, 1
    %s17 = ssub.s32 %s11, 2
    %s18 = sadd.s32 %s11, 1
    %s19 = ssub.s32 %s11, %s18
    %p20 = scmp.eq.s32.totalorder %s19, 0
    %s22 = sadd.s32 %s21, 1
    %s23 = scalar_select %p20, %s21, %s22
    %p26 = pneg %p20
    %p27 = scmp.eq.s32.totalorder %s11, 3
    %p28 = por %p26, %p27
    %p29 = scmp.ne.s32.totalorder %s21, %s24
    %p30 = scmp.eq.s32.totalorder %s11, 0
    %p31 = por %p29, %p30
    %p32 = scmp.ne.s32.totalorder %s21, %s24
    %p33 = scmp.eq.s32.totalorder %s16, 3
    %p34 = por %p32, %p33
    %p35 = scmp.ne.s32.totalorder %s24, %s25
    %p36 = scmp.eq.s32.totalorder %s16, 0
    %p37 = por %p35, %p36
    %p38 = scmp.ne.s32.totalorder %s24, %s25
    %p39 = scmp.eq.s32.totalorder %s17, 3
    %p40 = por %p38, %p39
    %p42 = scmp.ne.s32.totalorder %s25, %s41
    %p43 = scmp.eq.s32.totalorder %s17, 0
    %p44 = por %p42, %p43
    %s46 = sadd.s32 %s45, 1
    %p49 = scmp.eq.s32.totalorder %s11, 3
    %p50 = scmp.ne.s32.totalorder %s45, %s47
    %p51 = scmp.eq.s32.totalorder %s11, 0
    %p52 = por %p50, %p51
    %p53 = scmp.ne.s32.totalorder %s45, %s47
    %p54 = scmp.eq.s32.totalorder %s16, 3
    %p55 = por %p53, %p54
    %p56 = scmp.ne.s32.totalorder %s47, %s48
    %p57 = scmp.eq.s32.totalorder %s16, 0
    %p58 = por %p56, %p57
    %p59 = scmp.ne.s32.totalorder %s47, %s48
    %p60 = scmp.eq.s32.totalorder %s17, 3
    %p61 = por %p59, %p60
    %p63 = scmp.ne.s32.totalorder %s48, %s62
    %p64 = scmp.eq.s32.totalorder %s17, 0
    %p65 = por %p63, %p64
    %s67 = sadd.s32 %s66, 1
    %p70 = scmp.eq.s32.totalorder %s11, 3
    %p71 = scmp.ne.s32.totalorder %s66, %s68
    %p72 = scmp.eq.s32.totalorder %s11, 0
    %p73 = por %p71, %p72
    %p74 = scmp.ne.s32.totalorder %s66, %s68
    %p75 = scmp.eq.s32.totalorder %s16, 3
    %p76 = por %p74, %p75
    %p77 = scmp.ne.s32.totalorder %s68, %s69
    %p78 = scmp.eq.s32.totalorder %s16, 0
    %p79 = por %p77, %p78
    %p80 = scmp.ne.s32.totalorder %s68, %s69
    %p81 = scmp.eq.s32.totalorder %s17, 3
    %p82 = por %p80, %p81
    %p84 = scmp.ne.s32.totalorder %s69, %s83
    %p85 = scmp.eq.s32.totalorder %s17, 0
    %p86 = por %p84, %p85
    %s88 = sadd.s32 %s87, 1
    %p91 = scmp.eq.s32.totalorder %s11, 3
    %p92 = scmp.ne.s32.totalorder %s87, %s89
    %p93 = scmp.eq.s32.totalorder %s11, 0
    %p94 = por %p92, %p93
    %p95 = scmp.ne.s32.totalorder %s87, %s89
    %p96 = scmp.eq.s32.totalorder %s16, 3
    %p97 = por %p95, %p96
    %p98 = scmp.ne.s32.totalorder %s89, %s90
    %p99 = scmp.eq.s32.totalorder %s16, 0
    %p100 = por %p98, %p99
    %p101 = scmp.ne.s32.totalorder %s89, %s90
    %p102 = scmp.eq.s32.totalorder %s17, 3
    %p103 = por %p101, %p102
    %p105 = scmp.ne.s32.totalorder %s90, %s104
    %p106 = scmp.eq.s32.totalorder %s17, 0
    %p107 = por %p105, %p106
    %s109 = sadd.s32 %s108, 1
    %p112 = scmp.eq.s32.totalorder %s11, 3
    %p113 = scmp.ne.s32.totalorder %s108, %s110
    %p114 = scmp.eq.s32.totalorder %s11, 0
    %p115 = por %p113, %p114
    %p116 = scmp.ne.s32.totalorder %s108, %s110
    %p117 = scmp.eq.s32.totalorder %s16, 3
    %p118 = por %p116, %p117
    %p119 = scmp.ne.s32.totalorder %s110, %s111
    %p120 = scmp.eq.s32.totalorder %s16, 0
    %p121 = por %p119, %p120
    %p122 = scmp.ne.s32.totalorder %s110, %s111
    %p123 = scmp.eq.s32.totalorder %s17, 3
    %p124 = por %p122, %p123
    %p126 = scmp.ne.s32.totalorder %s111, %s125
    %p127 = scmp.eq.s32.totalorder %s17, 0
    %p128 = por %p126, %p127
    %s129 = ssub.s32 %s11, %s18
    %p130 = scmp.eq.s32.totalorder %s129, 0
    %s132 = sadd.s32 %s131, 1
    %s133 = scalar_select %p130, %s131, %s132
    %p136 = pneg %p130
    %p137 = scmp.eq.s32.totalorder %s11, 3
    %p138 = por %p136, %p137
    %p139 = scmp.ne.s32.totalorder %s131, %s134
    %p140 = scmp.eq.s32.totalorder %s11, 0
    %p141 = por %p139, %p140
    %p142 = scmp.ne.s32.totalorder %s131, %s134
    %p143 = scmp.eq.s32.totalorder %s16, 3
    %p144 = por %p142, %p143
    %p145 = scmp.ne.s32.totalorder %s134, %s135
    %p146 = scmp.eq.s32.totalorder %s16, 0
    %p147 = por %p145, %p146
    %p148 = scmp.ne.s32.totalorder %s134, %s135
    %p149 = scmp.eq.s32.totalorder %s17, 3
    %p150 = por %p148, %p149
    %p152 = scmp.ne.s32.totalorder %s135, %s151
    %p153 = scmp.eq.s32.totalorder %s17, 0
    %p154 = por %p152, %p153
    %p155 = scmp.le.s32.totalorder 1, %s11
    %p156 = scmp.lt.s32.totalorder %s11, 5
    %p157 = pnand %p155, %p156
    %p158 = pneg %p157
    // Predicated region
    $region9: #{tpu_custom_call.1} parent=5 // pred_check
      _
    $region10: #{tpu_custom_call.1} parent=5 // pred_check_branch
      %160 = sbr.rel (%p157) target = $region12
    $region11: #{tpu_custom_call.1} parent=5 // pred_region
      %s161 = ssub.s32 %s11, 1
      // Predicated region
      $region13: #{tpu_custom_call.1} parent=11 // pred_check
        %p162 = pneg %p58
      $region14: #{tpu_custom_call.1} parent=11 // pred_check_branch
        %164 = sbr.rel (%p162) target = $region16
      $region15: #{tpu_custom_call.1} parent=11 // pred_region
        _
      $region16: #{tpu_custom_call.1} parent=11 // pred_fallthru
        _
      // Predicated region
      $region17: #{tpu_custom_call.1} parent=11 // pred_check
        %p165 = pneg %p79
      $region18: #{tpu_custom_call.1} parent=11 // pred_check_branch
        %167 = sbr.rel (%p165) target = $region20
      $region19: #{tpu_custom_call.1} parent=11 // pred_region
        _
      $region20: #{tpu_custom_call.1} parent=11 // pred_fallthru
        _
      // Predicated region
      $region21: #{tpu_custom_call.1} parent=11 // pred_check
        %p168 = pneg %p100
      $region22: #{tpu_custom_call.1} parent=11 // pred_check_branch
        %170 = sbr.rel (%p168) target = $region24
      $region23: #{tpu_custom_call.1} parent=11 // pred_region
        _
      $region24: #{tpu_custom_call.1} parent=11 // pred_fallthru
        _
      // Predicated region
      $region25: #{tpu_custom_call.1} parent=11 // pred_check
        %p171 = pneg %p121
      $region26: #{tpu_custom_call.1} parent=11 // pred_check_branch
        %173 = sbr.rel (%p171) target = $region28
      $region27: #{tpu_custom_call.1} parent=11 // pred_region
        _
      $region28: #{tpu_custom_call.1} parent=11 // pred_fallthru
        _
    $region12: #{tpu_custom_call.1} parent=5 // pred_fallthru
      _
    %p174 = scmp.lt.s32.totalorder %s11, 4
    // Predicated region
    $region29: #{tpu_custom_call.1} parent=5 // pred_check
      %p175 = pneg %p174
    $region30: #{tpu_custom_call.1} parent=5 // pred_check_branch
      %177 = sbr.rel (%p175) target = $region32
    $region31: #{tpu_custom_call.1} parent=5 // pred_region
      // Predicated region
      $region33: #{tpu_custom_call.1} parent=31 // pred_check
        %p178 = pneg %p31
      $region34: #{tpu_custom_call.1} parent=31 // pred_check_branch
        %180 = sbr.rel (%p178) target = $region36
      $region35: #{tpu_custom_call.1} parent=31 // pred_region
        %s181 = smul.u32 64, %s11
        %p182 = scmp.lt.s32.totalorder %s181, 255
        %s183 = scalar_select %p182, %s181, 255
        %s184 = smul.addr %s183, 8
        %s185 = scalar_lea.vmem %s0, %s184
        %s186 = smul.u32 64, %s11
      $region36: #{tpu_custom_call.1} parent=31 // pred_fallthru
        _
    $region32: #{tpu_custom_call.1} parent=5 // pred_fallthru
      _
    %p187 = scmp.le.s32.totalorder 1, %s11
    %p188 = scmp.lt.s32.totalorder %s11, 5
    %p189 = pnand %p187, %p188
    %p190 = pneg %p189
    // Predicated region
    $region37: #{tpu_custom_call.1} parent=5 // pred_check
      _
    $region38: #{tpu_custom_call.1} parent=5 // pred_check_branch
      %192 = sbr.rel (%p189) target = $region40
    $region39: #{tpu_custom_call.1} parent=5 // pred_region
      %s193 = ssub.s32 %s11, 1
      %s194 = smul.u32 64, %s16
      %p195 = scmp.lt.s32.totalorder %s194, 255
      %s196 = scalar_select %p195, %s194, 255
      %s197 = smul.addr %s196, 8
      %s198 = scalar_lea.vmem %s0, %s197
      %p199 = pneg %p37
      %p200 = pneg %p34
      %p201 = pneg %p58
      %p202 = pneg %p55
      %p203 = pneg %p79
      %p204 = pneg %p76
      %p205 = pneg %p100
      %p206 = pneg %p97
      %p207 = pneg %p121
      %p208 = pneg %p118
      %p209 = pneg %p147
      %p210 = pneg %p144
      %s211 = smul.u32 64, %s16
      %p212 = scmp.lt.s32.totalorder %s211, 255
      %s213 = scalar_select %p212, %s211, 255
      %s214 = smul.addr %s213, 8
      %s215 = scalar_lea.vmem %s5, %s214
      %s216 = smul.u32 64, %s16
      %p217 = scmp.lt.s32.totalorder %s216, 255
      %s218 = scalar_select %p217, %s216, 255
      %s219 = smul.addr %s218, 8
      %s220 = scalar_lea.vmem %s0, %s219
      %s221 = smul.u32 64, %s16
      %s222 = smul.u32 64, %s16
      %p223 = scmp.lt.s32.totalorder %s222, 255
      %s224 = scalar_select %p223, %s222, 255
      %s225 = smul.addr %s224, 8
      %s226 = scalar_lea.vmem %s5, %s225
      %s227 = smul.u32 64, %s16
      %v228 = vld [vmem:[%s220] sm:$0xff]
      %v229 = vld [vmem:[%s220 + $0x8] sm:$0xff]
      %v230 = vld [vmem:[%s220 + $0x10] sm:$0xff]
      %v231 = vld [vmem:[%s220 + $0x18] sm:$0xff]
      %v232 = vld [vmem:[%s220 + $0x20] sm:$0xff]
      %v233 = vld [vmem:[%s220 + $0x28] sm:$0xff]
      %v234 = vld [vmem:[%s220 + $0x30] sm:$0xff]
      %v235 = vld [vmem:[%s220 + $0x38] sm:$0xff]
      %v236 = vld [vmem:[%s220 + $0x40] sm:$0xff]
      %v237 = vld [vmem:[%s220 + $0x48] sm:$0xff]
      %v238 = vld [vmem:[%s220 + $0x50] sm:$0xff]
      %v239 = vld [vmem:[%s220 + $0x58] sm:$0xff]
      %v240 = vld [vmem:[%s220 + $0x60] sm:$0xff]
      %v241 = vld [vmem:[%s220 + $0x68] sm:$0xff]
      %v242 = vld [vmem:[%s220 + $0x70] sm:$0xff]
      %v243 = vld [vmem:[%s220 + $0x78] sm:$0xff]
      %v244 = vld [vmem:[%s220 + $0x80] sm:$0xff]
      %v245 = vld [vmem:[%s220 + $0x88] sm:$0xff]
      %v246 = vld [vmem:[%s220 + $0x90] sm:$0xff]
      %v247 = vld [vmem:[%s220 + $0x98] sm:$0xff]
      %v248 = vld [vmem:[%s220 + $0xa0] sm:$0xff]
      %v249 = vld [vmem:[%s220 + $0xa8] sm:$0xff]
      %v250 = vld [vmem:[%s220 + $0xb0] sm:$0xff]
      %v251 = vld [vmem:[%s220 + $0xb8] sm:$0xff]
      %v252 = vld [vmem:[%s220 + $0xc0] sm:$0xff]
      %v253 = vld [vmem:[%s220 + $0xc8] sm:$0xff]
      %v254 = vld [vmem:[%s220 + $0xd0] sm:$0xff]
      %v255 = vld [vmem:[%s220 + $0xd8] sm:$0xff]
      %v256 = vld [vmem:[%s220 + $0xe0] sm:$0xff]
      %v257 = vld [vmem:[%s220 + $0xe8] sm:$0xff]
      %v258 = vld [vmem:[%s220 + $0xf0] sm:$0xff]
      %v259 = vld [vmem:[%s220 + $0xf8] sm:$0xff]
      %v260 = vld [vmem:[%s220 + $0x100] sm:$0xff]
      %v261 = vld [vmem:[%s220 + $0x108] sm:$0xff]
      %v262 = vld [vmem:[%s220 + $0x110] sm:$0xff]
      %v263 = vld [vmem:[%s220 + $0x118] sm:$0xff]
      %v264 = vld [vmem:[%s220 + $0x120] sm:$0xff]
      %v265 = vld [vmem:[%s220 + $0x128] sm:$0xff]
      %v266 = vld [vmem:[%s220 + $0x130] sm:$0xff]
      %v267 = vld [vmem:[%s220 + $0x138] sm:$0xff]
      %v268 = vld [vmem:[%s220 + $0x140] sm:$0xff]
      %v269 = vld [vmem:[%s220 + $0x148] sm:$0xff]
      %v270 = vld [vmem:[%s220 + $0x150] sm:$0xff]
      %v271 = vld [vmem:[%s220 + $0x158] sm:$0xff]
      %v272 = vld [vmem:[%s220 + $0x160] sm:$0xff]
      %v273 = vld [vmem:[%s220 + $0x168] sm:$0xff]
      %v274 = vld [vmem:[%s220 + $0x170] sm:$0xff]
      %v275 = vld [vmem:[%s220 + $0x178] sm:$0xff]
      %v276 = vld [vmem:[%s220 + $0x180] sm:$0xff]
      %v277 = vld [vmem:[%s220 + $0x188] sm:$0xff]
      %v278 = vld [vmem:[%s220 + $0x190] sm:$0xff]
      %v279 = vld [vmem:[%s220 + $0x198] sm:$0xff]
      %v280 = vld [vmem:[%s220 + $0x1a0] sm:$0xff]
      %v281 = vld [vmem:[%s220 + $0x1a8] sm:$0xff]
      %v282 = vld [vmem:[%s220 + $0x1b0] sm:$0xff]
      %v283 = vld [vmem:[%s220 + $0x1b8] sm:$0xff]
      %v284 = vld [vmem:[%s220 + $0x1c0] sm:$0xff]
      %v285 = vld [vmem:[%s220 + $0x1c8] sm:$0xff]
      %v286 = vld [vmem:[%s220 + $0x1d0] sm:$0xff]
      %v287 = vld [vmem:[%s220 + $0x1d8] sm:$0xff]
      %v288 = vld [vmem:[%s220 + $0x1e0] sm:$0xff]
      %v289 = vld [vmem:[%s220 + $0x1e8] sm:$0xff]
      %v290 = vld [vmem:[%s220 + $0x1f0] sm:$0xff]
      %v291 = vld [vmem:[%s220 + $0x1f8] sm:$0xff]
      %v292 = vld [vmem:[%s1] sm:$0xff]
      %v293 = vld [vmem:[%s1 + $0x8] sm:$0xff]
      %v294 = vld [vmem:[%s1 + $0x10] sm:$0xff]
      %v295 = vld [vmem:[%s1 + $0x18] sm:$0xff]
      %v296 = vld [vmem:[%s1 + $0x20] sm:$0xff]
      %v297 = vld [vmem:[%s1 + $0x28] sm:$0xff]
      %v298 = vld [vmem:[%s1 + $0x30] sm:$0xff]
      %v299 = vld [vmem:[%s1 + $0x38] sm:$0xff]
      %v300 = vld [vmem:[%s1 + $0x40] sm:$0xff]
      %v301 = vld [vmem:[%s1 + $0x48] sm:$0xff]
      %v302 = vld [vmem:[%s1 + $0x50] sm:$0xff]
      %v303 = vld [vmem:[%s1 + $0x58] sm:$0xff]
      %v304 = vld [vmem:[%s2] sm:$0x1]
      %v306 = vlaneseq
      %v307 = vshrl.u32 %v306, 7
      %v308 = vsub.s32 0, %v307
      %v309 = vrot.slane %v304, %v308
      %vm311 = vcmask 785408
      %v313 = vsel %vm311, %v228, 0
      %v316 = vsel %vm311, %v229, 0
      %v319 = vsel %vm311, %v230, 0
      %v322 = vsel %vm311, %v231, 0
      %v325 = vsel %vm311, %v232, 0
      %v328 = vsel %vm311, %v233, 0
      %v331 = vsel %vm311, %v234, 0
      %v334 = vsel %vm311, %v235, 0
      %v337 = vsel %vm311, %v236, 0
      %v340 = vsel %vm311, %v237, 0
      %v343 = vsel %vm311, %v238, 0
      %v346 = vsel %vm311, %v239, 0
      %v349 = vsel %vm311, %v240, 0
      %v352 = vsel %vm311, %v241, 0
      %v355 = vsel %vm311, %v242, 0
      %v358 = vsel %vm311, %v243, 0
      %v361 = vsel %vm311, %v244, 0
      %v364 = vsel %vm311, %v245, 0
      %v367 = vsel %vm311, %v246, 0
      %v370 = vsel %vm311, %v247, 0
      %v373 = vsel %vm311, %v248, 0
      %v376 = vsel %vm311, %v249, 0
      %v379 = vsel %vm311, %v250, 0
      %v382 = vsel %vm311, %v251, 0
      %v385 = vsel %vm311, %v252, 0
      %v388 = vsel %vm311, %v253, 0
      %v391 = vsel %vm311, %v254, 0
      %v394 = vsel %vm311, %v255, 0
      %v397 = vsel %vm311, %v256, 0
      %v400 = vsel %vm311, %v257, 0
      %v403 = vsel %vm311, %v258, 0
      %v406 = vsel %vm311, %v259, 0
      %v409 = vsel %vm311, %v260, 0
      %v412 = vsel %vm311, %v261, 0
      %v415 = vsel %vm311, %v262, 0
      %v418 = vsel %vm311, %v263, 0
      %v421 = vsel %vm311, %v264, 0
      %v424 = vsel %vm311, %v265, 0
      %v427 = vsel %vm311, %v266, 0
      %v430 = vsel %vm311, %v267, 0
      %v433 = vsel %vm311, %v268, 0
      %v436 = vsel %vm311, %v269, 0
      %v439 = vsel %vm311, %v270, 0
      %v442 = vsel %vm311, %v271, 0
      %v445 = vsel %vm311, %v272, 0
      %v448 = vsel %vm311, %v273, 0
      %v451 = vsel %vm311, %v274, 0
      %v454 = vsel %vm311, %v275, 0
      %v457 = vsel %vm311, %v276, 0
      %v460 = vsel %vm311, %v277, 0
      %v463 = vsel %vm311, %v278, 0
      %v466 = vsel %vm311, %v279, 0
      %v469 = vsel %vm311, %v280, 0
      %v472 = vsel %vm311, %v281, 0
      %v475 = vsel %vm311, %v282, 0
      %v478 = vsel %vm311, %v283, 0
      %v481 = vsel %vm311, %v284, 0
      %v484 = vsel %vm311, %v285, 0
      %v487 = vsel %vm311, %v286, 0
      %v490 = vsel %vm311, %v287, 0
      %v493 = vsel %vm311, %v288, 0
      %v496 = vsel %vm311, %v289, 0
      %v499 = vsel %vm311, %v290, 0
      %v502 = vsel %vm311, %v291, 0
      %504 = vmatprep.subr.mxu0 0.0
      %505 = vmatpush1.msra.mxu0 %v292
      %506 = vmatprep.subr.mxu0 0.0
      %507 = vmatpush1.msra.mxu0 %v293
      %508 = vmatprep.subr.mxu0 0.0
      %509 = vmatpush1.msra.mxu0 %v294
      %510 = vmatprep.subr.mxu0 0.0
      %511 = vmatpush1.msra.mxu0 %v295
      %512 = vmatprep.subr.mxu0 0.0
      %513 = vmatpush1.msra.mxu0 %v296
      %514 = vmatprep.subr.mxu0 0.0
      %515 = vmatpush1.msra.mxu0 %v297
      %516 = vmatprep.subr.mxu0 0.0
      %517 = vmatpush1.msra.mxu0 %v298
      %518 = vmatprep.subr.mxu0 0.0
      %519 = vmatpush1.msra.mxu0 %v299
      %520 = vmatprep.subr.mxu0 0.0
      %521 = vmatpush1.msra.mxu0 %v300
      %522 = vmatprep.subr.mxu0 0.0
      %523 = vmatpush1.msra.mxu0 %v301
      %524 = vmatprep.subr.mxu0 0.0
      %525 = vmatpush1.msra.mxu0 %v302
      %526 = vmatprep.subr.mxu0 0.0
      %527 = vmatpush1.msra.mxu0 %v303
      %528 = vmatprep.subr.mxu0 0.0
      %529 = vmatpush1.msra.mxu0 0.0
      %530 = vmatprep.subr.mxu0 0.0
      %531 = vmatpush1.msra.mxu0 0.0
      %532 = vmatprep.subr.mxu0 0.0
      %533 = vmatpush1.msra.mxu0 0.0
      %534 = vmatprep.subr.mxu0 0.0
      %535 = vmatpush1.msra.mxu0 0.0
      %536 = vmatprep.subr.mxu0 0.0
      %537 = vmatpush1.msra.mxu0 0.0
      %538 = vmatprep.subr.mxu0 0.0
      %539 = vmatpush1.msra.mxu0 0.0
      %540 = vmatprep.subr.mxu0 0.0
      %541 = vmatpush1.msra.mxu0 0.0
      %542 = vmatprep.subr.mxu0 0.0
      %543 = vmatpush1.msra.mxu0 0.0
      %544 = vmatprep.subr.mxu0 0.0
      %545 = vmatpush1.msra.mxu0 0.0
      %546 = vmatprep.subr.mxu0 0.0
      %547 = vmatpush1.msra.mxu0 0.0
      %548 = vmatprep.subr.mxu0 0.0
      %549 = vmatpush1.msra.mxu0 0.0
      %550 = vmatprep.subr.mxu0 0.0
      %551 = vmatpush1.msra.mxu0 0.0
      %552 = vmatprep.subr.mxu0 0.0
      %553 = vmatpush1.msra.mxu0 0.0
      %554 = vmatprep.subr.mxu0 0.0
      %555 = vmatpush1.msra.mxu0 0.0
      %556 = vmatprep.subr.mxu0 0.0
      %557 = vmatpush1.msra.mxu0 0.0
      %558 = vmatprep.subr.mxu0 0.0
      %559 = vmatpush1.msra.mxu0 0.0
      %560 = vmatprep.subr.mxu0 0.0
      %561 = vmatpush1.msra.mxu0 0.0
      %562 = vmatprep.subr.mxu0 0.0
      %563 = vmatpush1.msra.mxu0 0.0
      %564 = vmatprep.subr.mxu0 0.0
      %565 = vmatpush1.msra.mxu0 0.0
      %566 = vmatprep.subr.mxu0 0.0
      %567 = vmatpush1.msra.mxu0 0.0
      %568 = vmatprep.mubr.f32.mxu0 0.0
      %569 = vmatmul.mubr.f32.gmra.mrb[0].mxu0 %v313
      %v570 = vpop.f32.mrb[0].mxu0
      %v571 = vadd.f32 %v309, %v570
      %v572 = vpop.f32.mrb[0].mxu0
      %573 = vmatprep.mubr.f32.mxu0 0.0
      %574 = vmatmul.mubr.f32.gmra.mrb[0].mxu0 %v316
      %v575 = vpop.f32.mrb[0].mxu0
      %v576 = vadd.f32 %v309, %v575
      %v577 = vpop.f32.mrb[0].mxu0
      %578 = vmatprep.mubr.f32.mxu0 0.0
      %579 = vmatmul.mubr.f32.gmra.mrb[0].mxu0 %v319
      %v580 = vpop.f32.mrb[0].mxu0
      %v581 = vadd.f32 %v309, %v580
      %v582 = vpop.f32.mrb[0].mxu0
      %583 = vmatprep.mubr.f32.mxu0 0.0
      %584 = vmatmul.mubr.f32.gmra.mrb[0].mxu0 %v322
      %v585 = vpop.f32.mrb[0].mxu0
      %v586 = vadd.f32 %v309, %v585
      %v587 = vpop.f32.mrb[0].mxu0
      %588 = vmatprep.mubr.f32.mxu0 0.0
      %589 = vmatmul.mubr.f32.gmra.mrb[0].mxu0 %v325
      %v590 = vpop.f32.mrb[0].mxu0
      %v591 = vadd.f32 %v309, %v590
      %v592 = vpop.f32.mrb[0].mxu0
      %593 = vmatprep.mubr.f32.mxu0 0.0
      %594 = vmatmul.mubr.f32.gmra.mrb[0].mxu0 %v328
      %v595 = vpop.f32.mrb[0].mxu0
      %v596 = vadd.f32 %v309, %v595
      %v597 = vpop.f32.mrb[0].mxu0
      %598 = vmatprep.mubr.f32.mxu0 0.0
      %599 = vmatmul.mubr.f32.gmra.mrb[0].mxu0 %v331
      %v600 = vpop.f32.mrb[0].mxu0
      %v601 = vadd.f32 %v309, %v600
      %v602 = vpop.f32.mrb[0].mxu0
      %603 = vmatprep.mubr.f32.mxu0 0.0
      %604 = vmatmul.mubr.f32.gmra.mrb[0].mxu0 %v334
      %v605 = vpop.f32.mrb[0].mxu0
      %v606 = vadd.f32 %v309, %v605
      %v607 = vpop.f32.mrb[0].mxu0
      %608 = vmatprep.mubr.f32.mxu0 0.0
      %609 = vmatmul.mubr.f32.gmra.mrb[0].mxu0 %v337
      %v610 = vpop.f32.mrb[0].mxu0
      %v611 = vadd.f32 %v309, %v610
      %v612 = vpop.f32.mrb[0].mxu0
      %613 = vmatprep.mubr.f32.mxu0 0.0
      %614 = vmatmul.mubr.f32.gmra.mrb[0].mxu0 %v340
      %v615 = vpop.f32.mrb[0].mxu0
      %v616 = vadd.f32 %v309, %v615
      %v617 = vpop.f32.mrb[0].mxu0
      %618 = vmatprep.mubr.f32.mxu0 0.0
      %619 = vmatmul.mubr.f32.gmra.mrb[0].mxu0 %v343
      %v620 = vpop.f32.mrb[0].mxu0
      %v621 = vadd.f32 %v309, %v620
      %v622 = vpop.f32.mrb[0].mxu0
      %623 = vmatprep.mubr.f32.mxu0 0.0
      %624 = vmatmul.mubr.f32.gmra.mrb[0].mxu0 %v346
      %v625 = vpop.f32.mrb[0].mxu0
      %v626 = vadd.f32 %v309, %v625
      %v627 = vpop.f32.mrb[0].mxu0
      %628 = vmatprep.mubr.f32.mxu0 0.0
      %629 = vmatmul.mubr.f32.gmra.mrb[0].mxu0 %v349
      %v630 = vpop.f32.mrb[0].mxu0
      %v631 = vadd.f32 %v309, %v630
      %v632 = vpop.f32.mrb[0].mxu0
      %633 = vmatprep.mubr.f32.mxu0 0.0
      %634 = vmatmul.mubr.f32.gmra.mrb[0].mxu0 %v352
      %v635 = vpop.f32.mrb[0].mxu0
      %v636 = vadd.f32 %v309, %v635
      %v637 = vpop.f32.mrb[0].mxu0
      %638 = vmatprep.mubr.f32.mxu0 0.0
      %639 = vmatmul.mubr.f32.gmra.mrb[0].mxu0 %v355
      %v640 = vpop.f32.mrb[0].mxu0
      %v641 = vadd.f32 %v309, %v640
      %v642 = vpop.f32.mrb[0].mxu0
      %643 = vmatprep.mubr.f32.mxu0 0.0
      %644 = vmatmul.mubr.f32.gmra.mrb[0].mxu0 %v358
      %v645 = vpop.f32.mrb[0].mxu0
      %v646 = vadd.f32 %v309, %v645
      %v647 = vpop.f32.mrb[0].mxu0
      %648 = vmatprep.mubr.f32.mxu0 0.0
      %649 = vmatmul.mubr.f32.gmra.mrb[0].mxu0 %v361
      %v650 = vpop.f32.mrb[0].mxu0
      %v651 = vadd.f32 %v309, %v650
      %v652 = vpop.f32.mrb[0].mxu0
      %653 = vmatprep.mubr.f32.mxu0 0.0
      %654 = vmatmul.mubr.f32.gmra.mrb[0].mxu0 %v364
      %v655 = vpop.f32.mrb[0].mxu0
      %v656 = vadd.f32 %v309, %v655
      %v657 = vpop.f32.mrb[0].mxu0
      %658 = vmatprep.mubr.f32.mxu0 0.0
      %659 = vmatmul.mubr.f32.gmra.mrb[0].mxu0 %v367
      %v660 = vpop.f32.mrb[0].mxu0
      %v661 = vadd.f32 %v309, %v660
      %v662 = vpop.f32.mrb[0].mxu0
      %663 = vmatprep.mubr.f32.mxu0 0.0
      %664 = vmatmul.mubr.f32.gmra.mrb[0].mxu0 %v370
      %v665 = vpop.f32.mrb[0].mxu0
      %v666 = vadd.f32 %v309, %v665
      %v667 = vpop.f32.mrb[0].mxu0
      %668 = vmatprep.mubr.f32.mxu0 0.0
      %669 = vmatmul.mubr.f32.gmra.mrb[0].mxu0 %v373
      %v670 = vpop.f32.mrb[0].mxu0
      %v671 = vadd.f32 %v309, %v670
      %v672 = vpop.f32.mrb[0].mxu0
      %673 = vmatprep.mubr.f32.mxu0 0.0
      %674 = vmatmul.mubr.f32.gmra.mrb[0].mxu0 %v376
      %v675 = vpop.f32.mrb[0].mxu0
      %v676 = vadd.f32 %v309, %v675
      %v677 = vpop.f32.mrb[0].mxu0
      %678 = vmatprep.mubr.f32.mxu0 0.0
      %679 = vmatmul.mubr.f32.gmra.mrb[0].mxu0 %v379
      %v680 = vpop.f32.mrb[0].mxu0
      %v681 = vadd.f32 %v309, %v680
      %v682 = vpop.f32.mrb[0].mxu0
      %683 = vmatprep.mubr.f32.mxu0 0.0
      %684 = vmatmul.mubr.f32.gmra.mrb[0].mxu0 %v382
      %v685 = vpop.f32.mrb[0].mxu0
      %v686 = vadd.f32 %v309, %v685
      %v687 = vpop.f32.mrb[0].mxu0
      %688 = vmatprep.mubr.f32.mxu0 0.0
      %689 = vmatmul.mubr.f32.gmra.mrb[0].mxu0 %v385
      %v690 = vpop.f32.mrb[0].mxu0
      %v691 = vadd.f32 %v309, %v690
      %v692 = vpop.f32.mrb[0].mxu0
      %693 = vmatprep.mubr.f32.mxu0 0.0
      %694 = vmatmul.mubr.f32.gmra.mrb[0].mxu0 %v388
      %v695 = vpop.f32.mrb[0].mxu0
      %v696 = vadd.f32 %v309, %v695
      %v697 = vpop.f32.mrb[0].mxu0
      %698 = vmatprep.mubr.f32.mxu0 0.0
      %699 = vmatmul.mubr.f32.gmra.mrb[0].mxu0 %v391
      %v700 = vpop.f32.mrb[0].mxu0
      %v701 = vadd.f32 %v309, %v700
      %v702 = vpop.f32.mrb[0].mxu0
      %703 = vmatprep.mubr.f32.mxu0 0.0
      %704 = vmatmul.mubr.f32.gmra.mrb[0].mxu0 %v394
      %v705 = vpop.f32.mrb[0].mxu0
      %v706 = vadd.f32 %v309, %v705
      %v707 = vpop.f32.mrb[0].mxu0
      %708 = vmatprep.mubr.f32.mxu0 0.0
      %709 = vmatmul.mubr.f32.gmra.mrb[0].mxu0 %v397
      %v710 = vpop.f32.mrb[0].mxu0
      %v711 = vadd.f32 %v309, %v710
      %v712 = vpop.f32.mrb[0].mxu0
      %713 = vmatprep.mubr.f32.mxu0 0.0
      %714 = vmatmul.mubr.f32.gmra.mrb[0].mxu0 %v400
      %v715 = vpop.f32.mrb[0].mxu0
      %v716 = vadd.f32 %v309, %v715
      %v717 = vpop.f32.mrb[0].mxu0
      %718 = vmatprep.mubr.f32.mxu0 0.0
      %719 = vmatmul.mubr.f32.gmra.mrb[0].mxu0 %v403
      %v720 = vpop.f32.mrb[0].mxu0
      %v721 = vadd.f32 %v309, %v720
      %v722 = vpop.f32.mrb[0].mxu0
      %723 = vmatprep.mubr.f32.mxu0 0.0
      %724 = vmatmul.mubr.f32.gmra.mrb[0].mxu0 %v406
      %v725 = vpop.f32.mrb[0].mxu0
      %v726 = vadd.f32 %v309, %v725
      %v727 = vpop.f32.mrb[0].mxu0
      %728 = vmatprep.mubr.f32.mxu0 0.0
      %729 = vmatmul.mubr.f32.gmra.mrb[0].mxu0 %v409
      %v730 = vpop.f32.mrb[0].mxu0
      %v731 = vadd.f32 %v309, %v730
      %v732 = vpop.f32.mrb[0].mxu0
      %733 = vmatprep.mubr.f32.mxu0 0.0
      %734 = vmatmul.mubr.f32.gmra.mrb[0].mxu0 %v412
      %v735 = vpop.f32.mrb[0].mxu0
      %v736 = vadd.f32 %v309, %v735
      %v737 = vpop.f32.mrb[0].mxu0
      %738 = vmatprep.mubr.f32.mxu0 0.0
      %739 = vmatmul.mubr.f32.gmra.mrb[0].mxu0 %v415
      %v740 = vpop.f32.mrb[0].mxu0
      %v741 = vadd.f32 %v309, %v740
      %v742 = vpop.f32.mrb[0].mxu0
      %743 = vmatprep.mubr.f32.mxu0 0.0
      %744 = vmatmul.mubr.f32.gmra.mrb[0].mxu0 %v418
      %v745 = vpop.f32.mrb[0].mxu0
      %v746 = vadd.f32 %v309, %v745
      %v747 = vpop.f32.mrb[0].mxu0
      %748 = vmatprep.mubr.f32.mxu0 0.0
      %749 = vmatmul.mubr.f32.gmra.mrb[0].mxu0 %v421
      %v750 = vpop.f32.mrb[0].mxu0
      %v751 = vadd.f32 %v309, %v750
      %v752 = vpop.f32.mrb[0].mxu0
      %753 = vmatprep.mubr.f32.mxu0 0.0
      %754 = vmatmul.mubr.f32.gmra.mrb[0].mxu0 %v424
      %v755 = vpop.f32.mrb[0].mxu0
      %v756 = vadd.f32 %v309, %v755
      %v757 = vpop.f32.mrb[0].mxu0
      %758 = vmatprep.mubr.f32.mxu0 0.0
      %759 = vmatmul.mubr.f32.gmra.mrb[0].mxu0 %v427
      %v760 = vpop.f32.mrb[0].mxu0
      %v761 = vadd.f32 %v309, %v760
      %v762 = vpop.f32.mrb[0].mxu0
      %763 = vmatprep.mubr.f32.mxu0 0.0
      %764 = vmatmul.mubr.f32.gmra.mrb[0].mxu0 %v430
      %v765 = vpop.f32.mrb[0].mxu0
      %v766 = vadd.f32 %v309, %v765
      %v767 = vpop.f32.mrb[0].mxu0
      %768 = vmatprep.mubr.f32.mxu0 0.0
      %769 = vmatmul.mubr.f32.gmra.mrb[0].mxu0 %v433
      %v770 = vpop.f32.mrb[0].mxu0
      %v771 = vadd.f32 %v309, %v770
      %v772 = vpop.f32.mrb[0].mxu0
      %773 = vmatprep.mubr.f32.mxu0 0.0
      %774 = vmatmul.mubr.f32.gmra.mrb[0].mxu0 %v436
      %v775 = vpop.f32.mrb[0].mxu0
      %v776 = vadd.f32 %v309, %v775
      %v777 = vpop.f32.mrb[0].mxu0
      %778 = vmatprep.mubr.f32.mxu0 0.0
      %779 = vmatmul.mubr.f32.gmra.mrb[0].mxu0 %v439
      %v780 = vpop.f32.mrb[0].mxu0
      %v781 = vadd.f32 %v309, %v780
      %v782 = vpop.f32.mrb[0].mxu0
      %783 = vmatprep.mubr.f32.mxu0 0.0
      %784 = vmatmul.mubr.f32.gmra.mrb[0].mxu0 %v442
      %v785 = vpop.f32.mrb[0].mxu0
      %v786 = vadd.f32 %v309, %v785
      %v787 = vpop.f32.mrb[0].mxu0
      %788 = vmatprep.mubr.f32.mxu0 0.0
      %789 = vmatmul.mubr.f32.gmra.mrb[0].mxu0 %v445
      %v790 = vpop.f32.mrb[0].mxu0
      %v791 = vadd.f32 %v309, %v790
      %v792 = vpop.f32.mrb[0].mxu0
      %793 = vmatprep.mubr.f32.mxu0 0.0
      %794 = vmatmul.mubr.f32.gmra.mrb[0].mxu0 %v448
      %v795 = vpop.f32.mrb[0].mxu0
      %v796 = vadd.f32 %v309, %v795
      %v797 = vpop.f32.mrb[0].mxu0
      %798 = vmatprep.mubr.f32.mxu0 0.0
      %799 = vmatmul.mubr.f32.gmra.mrb[0].mxu0 %v451
      %v800 = vpop.f32.mrb[0].mxu0
      %v801 = vadd.f32 %v309, %v800
      %v802 = vpop.f32.mrb[0].mxu0
      %803 = vmatprep.mubr.f32.mxu0 0.0
      %804 = vmatmul.mubr.f32.gmra.mrb[0].mxu0 %v454
      %v805 = vpop.f32.mrb[0].mxu0
      %v806 = vadd.f32 %v309, %v805
      %v807 = vpop.f32.mrb[0].mxu0
      %808 = vmatprep.mubr.f32.mxu0 0.0
      %809 = vmatmul.mubr.f32.gmra.mrb[0].mxu0 %v457
      %v810 = vpop.f32.mrb[0].mxu0
      %v811 = vadd.f32 %v309, %v810
      %v812 = vpop.f32.mrb[0].mxu0
      %813 = vmatprep.mubr.f32.mxu0 0.0
      %814 = vmatmul.mubr.f32.gmra.mrb[0].mxu0 %v460
      %v815 = vpop.f32.mrb[0].mxu0
      %v816 = vadd.f32 %v309, %v815
      %v817 = vpop.f32.mrb[0].mxu0
      %818 = vmatprep.mubr.f32.mxu0 0.0
      %819 = vmatmul.mubr.f32.gmra.mrb[0].mxu0 %v463
      %v820 = vpop.f32.mrb[0].mxu0
      %v821 = vadd.f32 %v309, %v820
      %v822 = vpop.f32.mrb[0].mxu0
      %823 = vmatprep.mubr.f32.mxu0 0.0
      %824 = vmatmul.mubr.f32.gmra.mrb[0].mxu0 %v466
      %v825 = vpop.f32.mrb[0].mxu0
      %v826 = vadd.f32 %v309, %v825
      %v827 = vpop.f32.mrb[0].mxu0
      %828 = vmatprep.mubr.f32.mxu0 0.0
      %829 = vmatmul.mubr.f32.gmra.mrb[0].mxu0 %v469
      %v830 = vpop.f32.mrb[0].mxu0
      %v831 = vadd.f32 %v309, %v830
      %v832 = vpop.f32.mrb[0].mxu0
      %833 = vmatprep.mubr.f32.mxu0 0.0
      %834 = vmatmul.mubr.f32.gmra.mrb[0].mxu0 %v472
      %v835 = vpop.f32.mrb[0].mxu0
      %v836 = vadd.f32 %v309, %v835
      %v837 = vpop.f32.mrb[0].mxu0
      %838 = vmatprep.mubr.f32.mxu0 0.0
      %839 = vmatmul.mubr.f32.gmra.mrb[0].mxu0 %v475
      %v840 = vpop.f32.mrb[0].mxu0
      %v841 = vadd.f32 %v309, %v840
      %v842 = vpop.f32.mrb[0].mxu0
      %843 = vmatprep.mubr.f32.mxu0 0.0
      %844 = vmatmul.mubr.f32.gmra.mrb[0].mxu0 %v478
      %v845 = vpop.f32.mrb[0].mxu0
      %v846 = vadd.f32 %v309, %v845
      %v847 = vpop.f32.mrb[0].mxu0
      %848 = vmatprep.mubr.f32.mxu0 0.0
      %849 = vmatmul.mubr.f32.gmra.mrb[0].mxu0 %v481
      %v850 = vpop.f32.mrb[0].mxu0
      %v851 = vadd.f32 %v309, %v850
      %v852 = vpop.f32.mrb[0].mxu0
      %853 = vmatprep.mubr.f32.mxu0 0.0
      %854 = vmatmul.mubr.f32.gmra.mrb[0].mxu0 %v484
      %v855 = vpop.f32.mrb[0].mxu0
      %v856 = vadd.f32 %v309, %v855
      %v857 = vpop.f32.mrb[0].mxu0
      %858 = vmatprep.mubr.f32.mxu0 0.0
      %859 = vmatmul.mubr.f32.gmra.mrb[0].mxu0 %v487
      %v860 = vpop.f32.mrb[0].mxu0
      %v861 = vadd.f32 %v309, %v860
      %v862 = vpop.f32.mrb[0].mxu0
      %863 = vmatprep.mubr.f32.mxu0 0.0
      %864 = vmatmul.mubr.f32.gmra.mrb[0].mxu0 %v490
      %v865 = vpop.f32.mrb[0].mxu0
      %v866 = vadd.f32 %v309, %v865
      %v867 = vpop.f32.mrb[0].mxu0
      %868 = vmatprep.mubr.f32.mxu0 0.0
      %869 = vmatmul.mubr.f32.gmra.mrb[0].mxu0 %v493
      %v870 = vpop.f32.mrb[0].mxu0
      %v871 = vadd.f32 %v309, %v870
      %v872 = vpop.f32.mrb[0].mxu0
      %873 = vmatprep.mubr.f32.mxu0 0.0
      %874 = vmatmul.mubr.f32.gmra.mrb[0].mxu0 %v496
      %v875 = vpop.f32.mrb[0].mxu0
      %v876 = vadd.f32 %v309, %v875
      %v877 = vpop.f32.mrb[0].mxu0
      %878 = vmatprep.mubr.f32.mxu0 0.0
      %879 = vmatmul.mubr.f32.gmra.mrb[0].mxu0 %v499
      %v880 = vpop.f32.mrb[0].mxu0
      %v881 = vadd.f32 %v309, %v880
      %v882 = vpop.f32.mrb[0].mxu0
      %883 = vmatprep.mubr.f32.mxu0 0.0
      %884 = vmatmul.mubr.f32.gmra.mrb[0].mxu0 %v502
      %v885 = vpop.f32.mrb[0].mxu0
      %v886 = vadd.f32 %v309, %v885
      %v887 = vpop.f32.mrb[0].mxu0
      %888 = vdwg.mxu0
      %v889 = vmax.f32 %v571, 0.0
      %v890 = vmax.f32 %v576, 0.0
      %v891 = vmax.f32 %v581, 0.0
      %v892 = vmax.f32 %v586, 0.0
      %v893 = vmax.f32 %v591, 0.0
      %v894 = vmax.f32 %v596, 0.0
      %v895 = vmax.f32 %v601, 0.0
      %v896 = vmax.f32 %v606, 0.0
      %v897 = vmax.f32 %v611, 0.0
      %v898 = vmax.f32 %v616, 0.0
      %v899 = vmax.f32 %v621, 0.0
      %v900 = vmax.f32 %v626, 0.0
      %v901 = vmax.f32 %v631, 0.0
      %v902 = vmax.f32 %v636, 0.0
      %v903 = vmax.f32 %v641, 0.0
      %v904 = vmax.f32 %v646, 0.0
      %v905 = vmax.f32 %v651, 0.0
      %v906 = vmax.f32 %v656, 0.0
      %v907 = vmax.f32 %v661, 0.0
      %v908 = vmax.f32 %v666, 0.0
      %v909 = vmax.f32 %v671, 0.0
      %v910 = vmax.f32 %v676, 0.0
      %v911 = vmax.f32 %v681, 0.0
      %v912 = vmax.f32 %v686, 0.0
      %v913 = vmax.f32 %v691, 0.0
      %v914 = vmax.f32 %v696, 0.0
      %v915 = vmax.f32 %v701, 0.0
      %v916 = vmax.f32 %v706, 0.0
      %v917 = vmax.f32 %v711, 0.0
      %v918 = vmax.f32 %v716, 0.0
      %v919 = vmax.f32 %v721, 0.0
      %v920 = vmax.f32 %v726, 0.0
      %v921 = vmax.f32 %v731, 0.0
      %v922 = vmax.f32 %v736, 0.0
      %v923 = vmax.f32 %v741, 0.0
      %v924 = vmax.f32 %v746, 0.0
      %v925 = vmax.f32 %v751, 0.0
      %v926 = vmax.f32 %v756, 0.0
      %v927 = vmax.f32 %v761, 0.0
      %v928 = vmax.f32 %v766, 0.0
      %v929 = vmax.f32 %v771, 0.0
      %v930 = vmax.f32 %v776, 0.0
      %v931 = vmax.f32 %v781, 0.0
      %v932 = vmax.f32 %v786, 0.0
      %v933 = vmax.f32 %v791, 0.0
      %v934 = vmax.f32 %v796, 0.0
      %v935 = vmax.f32 %v801, 0.0
      %v936 = vmax.f32 %v806, 0.0
      %v937 = vmax.f32 %v811, 0.0
      %v938 = vmax.f32 %v816, 0.0
      %v939 = vmax.f32 %v821, 0.0
      %v940 = vmax.f32 %v826, 0.0
      %v941 = vmax.f32 %v831, 0.0
      %v942 = vmax.f32 %v836, 0.0
      %v943 = vmax.f32 %v841, 0.0
      %v944 = vmax.f32 %v846, 0.0
      %v945 = vmax.f32 %v851, 0.0
      %v946 = vmax.f32 %v856, 0.0
      %v947 = vmax.f32 %v861, 0.0
      %v948 = vmax.f32 %v866, 0.0
      %v949 = vmax.f32 %v871, 0.0
      %v950 = vmax.f32 %v876, 0.0
      %v951 = vmax.f32 %v881, 0.0
      %v952 = vmax.f32 %v886, 0.0
      %v953 = vld [vmem:[%s3] sm:$0xff]
      %v954 = vld [vmem:[%s3 + $0x8] sm:$0xff]
      %v955 = vld [vmem:[%s3 + $0x10] sm:$0xff]
      %v956 = vld [vmem:[%s3 + $0x18] sm:$0xff]
      %v957 = vld [vmem:[%s3 + $0x20] sm:$0xff]
      %v958 = vld [vmem:[%s3 + $0x28] sm:$0xff]
      %v959 = vld [vmem:[%s3 + $0x30] sm:$0xff]
      %v960 = vld [vmem:[%s3 + $0x38] sm:$0xff]
      %v961 = vld [vmem:[%s3 + $0x40] sm:$0xff]
      %v962 = vld [vmem:[%s3 + $0x48] sm:$0xff]
      %v963 = vld [vmem:[%s3 + $0x50] sm:$0xff]
      %v964 = vld [vmem:[%s3 + $0x58] sm:$0xff]
      %v965 = vld [vmem:[%s4] sm:$0x1]
      %v967 = vlaneseq
      %v968 = vshrl.u32 %v967, 7
      %v969 = vsub.s32 0, %v968
      %v970 = vrot.slane %v965, %v969
      %v973 = vsel %vm311, %v889, 0
      %v976 = vsel %vm311, %v890, 0
      %v979 = vsel %vm311, %v891, 0
      %v982 = vsel %vm311, %v892, 0
      %v985 = vsel %vm311, %v893, 0
      %v988 = vsel %vm311, %v894, 0
      %v991 = vsel %vm311, %v895, 0
      %v994 = vsel %vm311, %v896, 0
      %v997 = vsel %vm311, %v897, 0
      %v1000 = vsel %vm311, %v898, 0
      %v1003 = vsel %vm311, %v899, 0
      %v1006 = vsel %vm311, %v900, 0
      %v1009 = vsel %vm311, %v901, 0
      %v1012 = vsel %vm311, %v902, 0
      %v1015 = vsel %vm311, %v903, 0
      %v1018 = vsel %vm311, %v904, 0
      %v1021 = vsel %vm311, %v905, 0
      %v1024 = vsel %vm311, %v906, 0
      %v1027 = vsel %vm311, %v907, 0
      %v1030 = vsel %vm311, %v908, 0
      %v1033 = vsel %vm311, %v909, 0
      %v1036 = vsel %vm311, %v910, 0
      %v1039 = vsel %vm311, %v911, 0
      %v1042 = vsel %vm311, %v912, 0
      %v1045 = vsel %vm311, %v913, 0
      %v1048 = vsel %vm311, %v914, 0
      %v1051 = vsel %vm311, %v915, 0
      %v1054 = vsel %vm311, %v916, 0
      %v1057 = vsel %vm311, %v917, 0
      %v1060 = vsel %vm311, %v918, 0
      %v1063 = vsel %vm311, %v919, 0
      %v1066 = vsel %vm311, %v920, 0
      %v1069 = vsel %vm311, %v921, 0
      %v1072 = vsel %vm311, %v922, 0
      %v1075 = vsel %vm311, %v923, 0
      %v1078 = vsel %vm311, %v924, 0
      %v1081 = vsel %vm311, %v925, 0
      %v1084 = vsel %vm311, %v926, 0
      %v1087 = vsel %vm311, %v927, 0
      %v1090 = vsel %vm311, %v928, 0
      %v1093 = vsel %vm311, %v929, 0
      %v1096 = vsel %vm311, %v930, 0
      %v1099 = vsel %vm311, %v931, 0
      %v1102 = vsel %vm311, %v932, 0
      %v1105 = vsel %vm311, %v933, 0
      %v1108 = vsel %vm311, %v934, 0
      %v1111 = vsel %vm311, %v935, 0
      %v1114 = vsel %vm311, %v936, 0
      %v1117 = vsel %vm311, %v937, 0
      %v1120 = vsel %vm311, %v938, 0
      %v1123 = vsel %vm311, %v939, 0
      %v1126 = vsel %vm311, %v940, 0
      %v1129 = vsel %vm311, %v941, 0
      %v1132 = vsel %vm311, %v942, 0
      %v1135 = vsel %vm311, %v943, 0
      %v1138 = vsel %vm311, %v944, 0
      %v1141 = vsel %vm311, %v945, 0
      %v1144 = vsel %vm311, %v946, 0
      %v1147 = vsel %vm311, %v947, 0
      %v1150 = vsel %vm311, %v948, 0
      %v1153 = vsel %vm311, %v949, 0
      %v1156 = vsel %vm311, %v950, 0
      %v1159 = vsel %vm311, %v951, 0
      %v1162 = vsel %vm311, %v952, 0
      %1164 = vmatprep.subr.mxu0 0.0
      %1165 = vmatpush1.msra.mxu0 %v953
      %1166 = vmatprep.subr.mxu0 0.0
      %1167 = vmatpush1.msra.mxu0 %v954
      %1168 = vmatprep.subr.mxu0 0.0
      %1169 = vmatpush1.msra.mxu0 %v955
      %1170 = vmatprep.subr.mxu0 0.0
      %1171 = vmatpush1.msra.mxu0 %v956
      %1172 = vmatprep.subr.mxu0 0.0
      %1173 = vmatpush1.msra.mxu0 %v957
      %1174 = vmatprep.subr.mxu0 0.0
      %1175 = vmatpush1.msra.mxu0 %v958
      %1176 = vmatprep.subr.mxu0 0.0
      %1177 = vmatpush1.msra.mxu0 %v959
      %1178 = vmatprep.subr.mxu0 0.0
      %1179 = vmatpush1.msra.mxu0 %v960
      %1180 = vmatprep.subr.mxu0 0.0
      %1181 = vmatpush1.msra.mxu0 %v961
      %1182 = vmatprep.subr.mxu0 0.0
      %1183 = vmatpush1.msra.mxu0 %v962
      %1184 = vmatprep.subr.mxu0 0.0
      %1185 = vmatpush1.msra.mxu0 %v963
      %1186 = vmatprep.subr.mxu0 0.0
      %1187 = vmatpush1.msra.mxu0 %v964
      %1188 = vmatprep.subr.mxu0 0.0
      %1189 = vmatpush1.msra.mxu0 0.0
      %1190 = vmatprep.subr.mxu0 0.0
      %1191 = vmatpush1.msra.mxu0 0.0
      %1192 = vmatprep.subr.mxu0 0.0
      %1193 = vmatpush1.msra.mxu0 0.0
      %1194 = vmatprep.subr.mxu0 0.0
      %1195 = vmatpush1.msra.mxu0 0.0
      %1196 = vmatprep.subr.mxu0 0.0
      %1197 = vmatpush1.msra.mxu0 0.0
      %1198 = vmatprep.subr.mxu0 0.0
      %1199 = vmatpush1.msra.mxu0 0.0
      %1200 = vmatprep.subr.mxu0 0.0
      %1201 = vmatpush1.msra.mxu0 0.0
      %1202 = vmatprep.subr.mxu0 0.0
      %1203 = vmatpush1.msra.mxu0 0.0
      %1204 = vmatprep.subr.mxu0 0.0
      %1205 = vmatpush1.msra.mxu0 0.0
      %1206 = vmatprep.subr.mxu0 0.0
      %1207 = vmatpush1.msra.mxu0 0.0
      %1208 = vmatprep.subr.mxu0 0.0
      %1209 = vmatpush1.msra.mxu0 0.0
      %1210 = vmatprep.subr.mxu0 0.0
      %1211 = vmatpush1.msra.mxu0 0.0
      %1212 = vmatprep.subr.mxu0 0.0
      %1213 = vmatpush1.msra.mxu0 0.0
      %1214 = vmatprep.subr.mxu0 0.0
      %1215 = vmatpush1.msra.mxu0 0.0
      %1216 = vmatprep.subr.mxu0 0.0
      %1217 = vmatpush1.msra.mxu0 0.0
      %1218 = vmatprep.subr.mxu0 0.0
      %1219 = vmatpush1.msra.mxu0 0.0
      %1220 = vmatprep.subr.mxu0 0.0
      %1221 = vmatpush1.msra.mxu0 0.0
      %1222 = vmatprep.subr.mxu0 0.0
      %1223 = vmatpush1.msra.mxu0 0.0
      %1224 = vmatprep.subr.mxu0 0.0
      %1225 = vmatpush1.msra.mxu0 0.0
      %1226 = vmatprep.subr.mxu0 0.0
      %1227 = vmatpush1.msra.mxu0 0.0
      %1228 = vmatprep.mubr.f32.mxu0 0.0
      %1229 = vmatmul.mubr.f32.gmra.mrb[0].mxu0 %v973
      %v1230 = vpop.f32.mrb[0].mxu0
      %v1231 = vadd.f32 %v970, %v1230
      %v1232 = vpop.f32.mrb[0].mxu0
      %1233 = vmatprep.mubr.f32.mxu0 0.0
      %1234 = vmatmul.mubr.f32.gmra.mrb[0].mxu0 %v976
      %v1235 = vpop.f32.mrb[0].mxu0
      %v1236 = vadd.f32 %v970, %v1235
      %v1237 = vpop.f32.mrb[0].mxu0
      %1238 = vmatprep.mubr.f32.mxu0 0.0
      %1239 = vmatmul.mubr.f32.gmra.mrb[0].mxu0 %v979
      %v1240 = vpop.f32.mrb[0].mxu0
      %v1241 = vadd.f32 %v970, %v1240
      %v1242 = vpop.f32.mrb[0].mxu0
      %1243 = vmatprep.mubr.f32.mxu0 0.0
      %1244 = vmatmul.mubr.f32.gmra.mrb[0].mxu0 %v982
      %v1245 = vpop.f32.mrb[0].mxu0
      %v1246 = vadd.f32 %v970, %v1245
      %v1247 = vpop.f32.mrb[0].mxu0
      %1248 = vmatprep.mubr.f32.mxu0 0.0
      %1249 = vmatmul.mubr.f32.gmra.mrb[0].mxu0 %v985
      %v1250 = vpop.f32.mrb[0].mxu0
      %v1251 = vadd.f32 %v970, %v1250
      %v1252 = vpop.f32.mrb[0].mxu0
      %1253 = vmatprep.mubr.f32.mxu0 0.0
      %1254 = vmatmul.mubr.f32.gmra.mrb[0].mxu0 %v988
      %v1255 = vpop.f32.mrb[0].mxu0
      %v1256 = vadd.f32 %v970, %v1255
      %v1257 = vpop.f32.mrb[0].mxu0
      %1258 = vmatprep.mubr.f32.mxu0 0.0
      %1259 = vmatmul.mubr.f32.gmra.mrb[0].mxu0 %v991
      %v1260 = vpop.f32.mrb[0].mxu0
      %v1261 = vadd.f32 %v970, %v1260
      %v1262 = vpop.f32.mrb[0].mxu0
      %1263 = vmatprep.mubr.f32.mxu0 0.0
      %1264 = vmatmul.mubr.f32.gmra.mrb[0].mxu0 %v994
      %v1265 = vpop.f32.mrb[0].mxu0
      %v1266 = vadd.f32 %v970, %v1265
      %v1267 = vpop.f32.mrb[0].mxu0
      %1268 = vmatprep.mubr.f32.mxu0 0.0
      %1269 = vmatmul.mubr.f32.gmra.mrb[0].mxu0 %v997
      %v1270 = vpop.f32.mrb[0].mxu0
      %v1271 = vadd.f32 %v970, %v1270
      %v1272 = vpop.f32.mrb[0].mxu0
      %1273 = vmatprep.mubr.f32.mxu0 0.0
      %1274 = vmatmul.mubr.f32.gmra.mrb[0].mxu0 %v1000
      %v1275 = vpop.f32.mrb[0].mxu0
      %v1276 = vadd.f32 %v970, %v1275
      %v1277 = vpop.f32.mrb[0].mxu0
      %1278 = vmatprep.mubr.f32.mxu0 0.0
      %1279 = vmatmul.mubr.f32.gmra.mrb[0].mxu0 %v1003
      %v1280 = vpop.f32.mrb[0].mxu0
      %v1281 = vadd.f32 %v970, %v1280
      %v1282 = vpop.f32.mrb[0].mxu0
      %1283 = vmatprep.mubr.f32.mxu0 0.0
      %1284 = vmatmul.mubr.f32.gmra.mrb[0].mxu0 %v1006
      %v1285 = vpop.f32.mrb[0].mxu0
      %v1286 = vadd.f32 %v970, %v1285
      %v1287 = vpop.f32.mrb[0].mxu0
      %1288 = vmatprep.mubr.f32.mxu0 0.0
      %1289 = vmatmul.mubr.f32.gmra.mrb[0].mxu0 %v1009
      %v1290 = vpop.f32.mrb[0].mxu0
      %v1291 = vadd.f32 %v970, %v1290
      %v1292 = vpop.f32.mrb[0].mxu0
      %1293 = vmatprep.mubr.f32.mxu0 0.0
      %1294 = vmatmul.mubr.f32.gmra.mrb[0].mxu0 %v1012
      %v1295 = vpop.f32.mrb[0].mxu0
      %v1296 = vadd.f32 %v970, %v1295
      %v1297 = vpop.f32.mrb[0].mxu0
      %1298 = vmatprep.mubr.f32.mxu0 0.0
      %1299 = vmatmul.mubr.f32.gmra.mrb[0].mxu0 %v1015
      %v1300 = vpop.f32.mrb[0].mxu0
      %v1301 = vadd.f32 %v970, %v1300
      %v1302 = vpop.f32.mrb[0].mxu0
      %1303 = vmatprep.mubr.f32.mxu0 0.0
      %1304 = vmatmul.mubr.f32.gmra.mrb[0].mxu0 %v1018
      %v1305 = vpop.f32.mrb[0].mxu0
      %v1306 = vadd.f32 %v970, %v1305
      %v1307 = vpop.f32.mrb[0].mxu0
      %1308 = vmatprep.mubr.f32.mxu0 0.0
      %1309 = vmatmul.mubr.f32.gmra.mrb[0].mxu0 %v1021
      %v1310 = vpop.f32.mrb[0].mxu0
      %v1311 = vadd.f32 %v970, %v1310
      %v1312 = vpop.f32.mrb[0].mxu0
      %1313 = vmatprep.mubr.f32.mxu0 0.0
      %1314 = vmatmul.mubr.f32.gmra.mrb[0].mxu0 %v1024
      %v1315 = vpop.f32.mrb[0].mxu0
      %v1316 = vadd.f32 %v970, %v1315
      %v1317 = vpop.f32.mrb[0].mxu0
      %1318 = vmatprep.mubr.f32.mxu0 0.0
      %1319 = vmatmul.mubr.f32.gmra.mrb[0].mxu0 %v1027
      %v1320 = vpop.f32.mrb[0].mxu0
      %v1321 = vadd.f32 %v970, %v1320
      %v1322 = vpop.f32.mrb[0].mxu0
      %1323 = vmatprep.mubr.f32.mxu0 0.0
      %1324 = vmatmul.mubr.f32.gmra.mrb[0].mxu0 %v1030
      %v1325 = vpop.f32.mrb[0].mxu0
      %v1326 = vadd.f32 %v970, %v1325
      %v1327 = vpop.f32.mrb[0].mxu0
      %1328 = vmatprep.mubr.f32.mxu0 0.0
      %1329 = vmatmul.mubr.f32.gmra.mrb[0].mxu0 %v1033
      %v1330 = vpop.f32.mrb[0].mxu0
      %v1331 = vadd.f32 %v970, %v1330
      %v1332 = vpop.f32.mrb[0].mxu0
      %1333 = vmatprep.mubr.f32.mxu0 0.0
      %1334 = vmatmul.mubr.f32.gmra.mrb[0].mxu0 %v1036
      %v1335 = vpop.f32.mrb[0].mxu0
      %v1336 = vadd.f32 %v970, %v1335
      %v1337 = vpop.f32.mrb[0].mxu0
      %1338 = vmatprep.mubr.f32.mxu0 0.0
      %1339 = vmatmul.mubr.f32.gmra.mrb[0].mxu0 %v1039
      %v1340 = vpop.f32.mrb[0].mxu0
      %v1341 = vadd.f32 %v970, %v1340
      %v1342 = vpop.f32.mrb[0].mxu0
      %1343 = vmatprep.mubr.f32.mxu0 0.0
      %1344 = vmatmul.mubr.f32.gmra.mrb[0].mxu0 %v1042
      %v1345 = vpop.f32.mrb[0].mxu0
      %v1346 = vadd.f32 %v970, %v1345
      %v1347 = vpop.f32.mrb[0].mxu0
      %1348 = vmatprep.mubr.f32.mxu0 0.0
      %1349 = vmatmul.mubr.f32.gmra.mrb[0].mxu0 %v1045
      %v1350 = vpop.f32.mrb[0].mxu0
      %v1351 = vadd.f32 %v970, %v1350
      %v1352 = vpop.f32.mrb[0].mxu0
      %1353 = vmatprep.mubr.f32.mxu0 0.0
      %1354 = vmatmul.mubr.f32.gmra.mrb[0].mxu0 %v1048
      %v1355 = vpop.f32.mrb[0].mxu0
      %v1356 = vadd.f32 %v970, %v1355
      %v1357 = vpop.f32.mrb[0].mxu0
      %1358 = vmatprep.mubr.f32.mxu0 0.0
      %1359 = vmatmul.mubr.f32.gmra.mrb[0].mxu0 %v1051
      %v1360 = vpop.f32.mrb[0].mxu0
      %v1361 = vadd.f32 %v970, %v1360
      %v1362 = vpop.f32.mrb[0].mxu0
      %1363 = vmatprep.mubr.f32.mxu0 0.0
      %1364 = vmatmul.mubr.f32.gmra.mrb[0].mxu0 %v1054
      %v1365 = vpop.f32.mrb[0].mxu0
      %v1366 = vadd.f32 %v970, %v1365
      %v1367 = vpop.f32.mrb[0].mxu0
      %1368 = vmatprep.mubr.f32.mxu0 0.0
      %1369 = vmatmul.mubr.f32.gmra.mrb[0].mxu0 %v1057
      %v1370 = vpop.f32.mrb[0].mxu0
      %v1371 = vadd.f32 %v970, %v1370
      %v1372 = vpop.f32.mrb[0].mxu0
      %1373 = vmatprep.mubr.f32.mxu0 0.0
      %1374 = vmatmul.mubr.f32.gmra.mrb[0].mxu0 %v1060
      %v1375 = vpop.f32.mrb[0].mxu0
      %v1376 = vadd.f32 %v970, %v1375
      %v1377 = vpop.f32.mrb[0].mxu0
      %1378 = vmatprep.mubr.f32.mxu0 0.0
      %1379 = vmatmul.mubr.f32.gmra.mrb[0].mxu0 %v1063
      %v1380 = vpop.f32.mrb[0].mxu0
      %v1381 = vadd.f32 %v970, %v1380
      %v1382 = vpop.f32.mrb[0].mxu0
      %1383 = vmatprep.mubr.f32.mxu0 0.0
      %1384 = vmatmul.mubr.f32.gmra.mrb[0].mxu0 %v1066
      %v1385 = vpop.f32.mrb[0].mxu0
      %v1386 = vadd.f32 %v970, %v1385
      %v1387 = vpop.f32.mrb[0].mxu0
      %1388 = vmatprep.mubr.f32.mxu0 0.0
      %1389 = vmatmul.mubr.f32.gmra.mrb[0].mxu0 %v1069
      %v1390 = vpop.f32.mrb[0].mxu0
      %v1391 = vadd.f32 %v970, %v1390
      %v1392 = vpop.f32.mrb[0].mxu0
      %1393 = vmatprep.mubr.f32.mxu0 0.0
      %1394 = vmatmul.mubr.f32.gmra.mrb[0].mxu0 %v1072
      %v1395 = vpop.f32.mrb[0].mxu0
      %v1396 = vadd.f32 %v970, %v1395
      %v1397 = vpop.f32.mrb[0].mxu0
      %1398 = vmatprep.mubr.f32.mxu0 0.0
      %1399 = vmatmul.mubr.f32.gmra.mrb[0].mxu0 %v1075
      %v1400 = vpop.f32.mrb[0].mxu0
      %v1401 = vadd.f32 %v970, %v1400
      %v1402 = vpop.f32.mrb[0].mxu0
      %1403 = vmatprep.mubr.f32.mxu0 0.0
      %1404 = vmatmul.mubr.f32.gmra.mrb[0].mxu0 %v1078
      %v1405 = vpop.f32.mrb[0].mxu0
      %v1406 = vadd.f32 %v970, %v1405
      %v1407 = vpop.f32.mrb[0].mxu0
      %1408 = vmatprep.mubr.f32.mxu0 0.0
      %1409 = vmatmul.mubr.f32.gmra.mrb[0].mxu0 %v1081
      %v1410 = vpop.f32.mrb[0].mxu0
      %v1411 = vadd.f32 %v970, %v1410
      %v1412 = vpop.f32.mrb[0].mxu0
      %1413 = vmatprep.mubr.f32.mxu0 0.0
      %1414 = vmatmul.mubr.f32.gmra.mrb[0].mxu0 %v1084
      %v1415 = vpop.f32.mrb[0].mxu0
      %v1416 = vadd.f32 %v970, %v1415
      %v1417 = vpop.f32.mrb[0].mxu0
      %1418 = vmatprep.mubr.f32.mxu0 0.0
      %1419 = vmatmul.mubr.f32.gmra.mrb[0].mxu0 %v1087
      %v1420 = vpop.f32.mrb[0].mxu0
      %v1421 = vadd.f32 %v970, %v1420
      %v1422 = vpop.f32.mrb[0].mxu0
      %1423 = vmatprep.mubr.f32.mxu0 0.0
      %1424 = vmatmul.mubr.f32.gmra.mrb[0].mxu0 %v1090
      %v1425 = vpop.f32.mrb[0].mxu0
      %v1426 = vadd.f32 %v970, %v1425
      %v1427 = vpop.f32.mrb[0].mxu0
      %1428 = vmatprep.mubr.f32.mxu0 0.0
      %1429 = vmatmul.mubr.f32.gmra.mrb[0].mxu0 %v1093
      %v1430 = vpop.f32.mrb[0].mxu0
      %v1431 = vadd.f32 %v970, %v1430
      %v1432 = vpop.f32.mrb[0].mxu0
      %1433 = vmatprep.mubr.f32.mxu0 0.0
      %1434 = vmatmul.mubr.f32.gmra.mrb[0].mxu0 %v1096
      %v1435 = vpop.f32.mrb[0].mxu0
      %v1436 = vadd.f32 %v970, %v1435
      %v1437 = vpop.f32.mrb[0].mxu0
      %1438 = vmatprep.mubr.f32.mxu0 0.0
      %1439 = vmatmul.mubr.f32.gmra.mrb[0].mxu0 %v1099
      %v1440 = vpop.f32.mrb[0].mxu0
      %v1441 = vadd.f32 %v970, %v1440
      %v1442 = vpop.f32.mrb[0].mxu0
      %1443 = vmatprep.mubr.f32.mxu0 0.0
      %1444 = vmatmul.mubr.f32.gmra.mrb[0].mxu0 %v1102
      %v1445 = vpop.f32.mrb[0].mxu0
      %v1446 = vadd.f32 %v970, %v1445
      %v1447 = vpop.f32.mrb[0].mxu0
      %1448 = vmatprep.mubr.f32.mxu0 0.0
      %1449 = vmatmul.mubr.f32.gmra.mrb[0].mxu0 %v1105
      %v1450 = vpop.f32.mrb[0].mxu0
      %v1451 = vadd.f32 %v970, %v1450
      %v1452 = vpop.f32.mrb[0].mxu0
      %1453 = vmatprep.mubr.f32.mxu0 0.0
      %1454 = vmatmul.mubr.f32.gmra.mrb[0].mxu0 %v1108
      %v1455 = vpop.f32.mrb[0].mxu0
      %v1456 = vadd.f32 %v970, %v1455
      %v1457 = vpop.f32.mrb[0].mxu0
      %1458 = vmatprep.mubr.f32.mxu0 0.0
      %1459 = vmatmul.mubr.f32.gmra.mrb[0].mxu0 %v1111
      %v1460 = vpop.f32.mrb[0].mxu0
      %v1461 = vadd.f32 %v970, %v1460
      %v1462 = vpop.f32.mrb[0].mxu0
      %1463 = vmatprep.mubr.f32.mxu0 0.0
      %1464 = vmatmul.mubr.f32.gmra.mrb[0].mxu0 %v1114
      %v1465 = vpop.f32.mrb[0].mxu0
      %v1466 = vadd.f32 %v970, %v1465
      %v1467 = vpop.f32.mrb[0].mxu0
      %1468 = vmatprep.mubr.f32.mxu0 0.0
      %1469 = vmatmul.mubr.f32.gmra.mrb[0].mxu0 %v1117
      %v1470 = vpop.f32.mrb[0].mxu0
      %v1471 = vadd.f32 %v970, %v1470
      %v1472 = vpop.f32.mrb[0].mxu0
      %1473 = vmatprep.mubr.f32.mxu0 0.0
      %1474 = vmatmul.mubr.f32.gmra.mrb[0].mxu0 %v1120
      %v1475 = vpop.f32.mrb[0].mxu0
      %v1476 = vadd.f32 %v970, %v1475
      %v1477 = vpop.f32.mrb[0].mxu0
      %1478 = vmatprep.mubr.f32.mxu0 0.0
      %1479 = vmatmul.mubr.f32.gmra.mrb[0].mxu0 %v1123
      %v1480 = vpop.f32.mrb[0].mxu0
      %v1481 = vadd.f32 %v970, %v1480
      %v1482 = vpop.f32.mrb[0].mxu0
      %1483 = vmatprep.mubr.f32.mxu0 0.0
      %1484 = vmatmul.mubr.f32.gmra.mrb[0].mxu0 %v1126
      %v1485 = vpop.f32.mrb[0].mxu0
      %v1486 = vadd.f32 %v970, %v1485
      %v1487 = vpop.f32.mrb[0].mxu0
      %1488 = vmatprep.mubr.f32.mxu0 0.0
      %1489 = vmatmul.mubr.f32.gmra.mrb[0].mxu0 %v1129
      %v1490 = vpop.f32.mrb[0].mxu0
      %v1491 = vadd.f32 %v970, %v1490
      %v1492 = vpop.f32.mrb[0].mxu0
      %1493 = vmatprep.mubr.f32.mxu0 0.0
      %1494 = vmatmul.mubr.f32.gmra.mrb[0].mxu0 %v1132
      %v1495 = vpop.f32.mrb[0].mxu0
      %v1496 = vadd.f32 %v970, %v1495
      %v1497 = vpop.f32.mrb[0].mxu0
      %1498 = vmatprep.mubr.f32.mxu0 0.0
      %1499 = vmatmul.mubr.f32.gmra.mrb[0].mxu0 %v1135
      %v1500 = vpop.f32.mrb[0].mxu0
      %v1501 = vadd.f32 %v970, %v1500
      %v1502 = vpop.f32.mrb[0].mxu0
      %1503 = vmatprep.mubr.f32.mxu0 0.0
      %1504 = vmatmul.mubr.f32.gmra.mrb[0].mxu0 %v1138
      %v1505 = vpop.f32.mrb[0].mxu0
      %v1506 = vadd.f32 %v970, %v1505
      %v1507 = vpop.f32.mrb[0].mxu0
      %1508 = vmatprep.mubr.f32.mxu0 0.0
      %1509 = vmatmul.mubr.f32.gmra.mrb[0].mxu0 %v1141
      %v1510 = vpop.f32.mrb[0].mxu0
      %v1511 = vadd.f32 %v970, %v1510
      %v1512 = vpop.f32.mrb[0].mxu0
      %1513 = vmatprep.mubr.f32.mxu0 0.0
      %1514 = vmatmul.mubr.f32.gmra.mrb[0].mxu0 %v1144
      %v1515 = vpop.f32.mrb[0].mxu0
      %v1516 = vadd.f32 %v970, %v1515
      %v1517 = vpop.f32.mrb[0].mxu0
      %1518 = vmatprep.mubr.f32.mxu0 0.0
      %1519 = vmatmul.mubr.f32.gmra.mrb[0].mxu0 %v1147
      %v1520 = vpop.f32.mrb[0].mxu0
      %v1521 = vadd.f32 %v970, %v1520
      %v1522 = vpop.f32.mrb[0].mxu0
      %1523 = vmatprep.mubr.f32.mxu0 0.0
      %1524 = vmatmul.mubr.f32.gmra.mrb[0].mxu0 %v1150
      %v1525 = vpop.f32.mrb[0].mxu0
      %v1526 = vadd.f32 %v970, %v1525
      %v1527 = vpop.f32.mrb[0].mxu0
      %1528 = vmatprep.mubr.f32.mxu0 0.0
      %1529 = vmatmul.mubr.f32.gmra.mrb[0].mxu0 %v1153
      %v1530 = vpop.f32.mrb[0].mxu0
      %v1531 = vadd.f32 %v970, %v1530
      %v1532 = vpop.f32.mrb[0].mxu0
      %1533 = vmatprep.mubr.f32.mxu0 0.0
      %1534 = vmatmul.mubr.f32.gmra.mrb[0].mxu0 %v1156
      %v1535 = vpop.f32.mrb[0].mxu0
      %v1536 = vadd.f32 %v970, %v1535
      %v1537 = vpop.f32.mrb[0].mxu0
      %1538 = vmatprep.mubr.f32.mxu0 0.0
      %1539 = vmatmul.mubr.f32.gmra.mrb[0].mxu0 %v1159
      %v1540 = vpop.f32.mrb[0].mxu0
      %v1541 = vadd.f32 %v970, %v1540
      %v1542 = vpop.f32.mrb[0].mxu0
      %1543 = vmatprep.mubr.f32.mxu0 0.0
      %1544 = vmatmul.mubr.f32.gmra.mrb[0].mxu0 %v1162
      %v1545 = vpop.f32.mrb[0].mxu0
      %v1546 = vadd.f32 %v970, %v1545
      %v1547 = vpop.f32.mrb[0].mxu0
      %1548 = vdwg.mxu0
      %vm1549 = vcmask 130048
      %1550 = vst.msk [vmem:[%s226] sm:$0xff] %vm1549, %v1231
      %1551 = vst.msk [vmem:[%s226 + $0x8] sm:$0xff] %vm1549, %v1236
      %1552 = vst.msk [vmem:[%s226 + $0x10] sm:$0xff] %vm1549, %v1241
      %1553 = vst.msk [vmem:[%s226 + $0x18] sm:$0xff] %vm1549, %v1246
      %1554 = vst.msk [vmem:[%s226 + $0x20] sm:$0xff] %vm1549, %v1251
      %1555 = vst.msk [vmem:[%s226 + $0x28] sm:$0xff] %vm1549, %v1256
      %1556 = vst.msk [vmem:[%s226 + $0x30] sm:$0xff] %vm1549, %v1261
      %1557 = vst.msk [vmem:[%s226 + $0x38] sm:$0xff] %vm1549, %v1266
      %1558 = vst.msk [vmem:[%s226 + $0x40] sm:$0xff] %vm1549, %v1271
      %1559 = vst.msk [vmem:[%s226 + $0x48] sm:$0xff] %vm1549, %v1276
      %1560 = vst.msk [vmem:[%s226 + $0x50] sm:$0xff] %vm1549, %v1281
      %1561 = vst.msk [vmem:[%s226 + $0x58] sm:$0xff] %vm1549, %v1286
      %1562 = vst.msk [vmem:[%s226 + $0x60] sm:$0xff] %vm1549, %v1291
      %1563 = vst.msk [vmem:[%s226 + $0x68] sm:$0xff] %vm1549, %v1296
      %1564 = vst.msk [vmem:[%s226 + $0x70] sm:$0xff] %vm1549, %v1301
      %1565 = vst.msk [vmem:[%s226 + $0x78] sm:$0xff] %vm1549, %v1306
      %1566 = vst.msk [vmem:[%s226 + $0x80] sm:$0xff] %vm1549, %v1311
      %1567 = vst.msk [vmem:[%s226 + $0x88] sm:$0xff] %vm1549, %v1316
      %1568 = vst.msk [vmem:[%s226 + $0x90] sm:$0xff] %vm1549, %v1321
      %1569 = vst.msk [vmem:[%s226 + $0x98] sm:$0xff] %vm1549, %v1326
      %1570 = vst.msk [vmem:[%s226 + $0xa0] sm:$0xff] %vm1549, %v1331
      %1571 = vst.msk [vmem:[%s226 + $0xa8] sm:$0xff] %vm1549, %v1336
      %1572 = vst.msk [vmem:[%s226 + $0xb0] sm:$0xff] %vm1549, %v1341
      %1573 = vst.msk [vmem:[%s226 + $0xb8] sm:$0xff] %vm1549, %v1346
      %1574 = vst.msk [vmem:[%s226 + $0xc0] sm:$0xff] %vm1549, %v1351
      %1575 = vst.msk [vmem:[%s226 + $0xc8] sm:$0xff] %vm1549, %v1356
      %1576 = vst.msk [vmem:[%s226 + $0xd0] sm:$0xff] %vm1549, %v1361
      %1577 = vst.msk [vmem:[%s226 + $0xd8] sm:$0xff] %vm1549, %v1366
      %1578 = vst.msk [vmem:[%s226 + $0xe0] sm:$0xff] %vm1549, %v1371
      %1579 = vst.msk [vmem:[%s226 + $0xe8] sm:$0xff] %vm1549, %v1376
      %1580 = vst.msk [vmem:[%s226 + $0xf0] sm:$0xff] %vm1549, %v1381
      %1581 = vst.msk [vmem:[%s226 + $0xf8] sm:$0xff] %vm1549, %v1386
      %1582 = vst.msk [vmem:[%s226 + $0x100] sm:$0xff] %vm1549, %v1391
      %1583 = vst.msk [vmem:[%s226 + $0x108] sm:$0xff] %vm1549, %v1396
      %1584 = vst.msk [vmem:[%s226 + $0x110] sm:$0xff] %vm1549, %v1401
      %1585 = vst.msk [vmem:[%s226 + $0x118] sm:$0xff] %vm1549, %v1406
      %1586 = vst.msk [vmem:[%s226 + $0x120] sm:$0xff] %vm1549, %v1411
      %1587 = vst.msk [vmem:[%s226 + $0x128] sm:$0xff] %vm1549, %v1416
      %1588 = vst.msk [vmem:[%s226 + $0x130] sm:$0xff] %vm1549, %v1421
      %1589 = vst.msk [vmem:[%s226 + $0x138] sm:$0xff] %vm1549, %v1426
      %1590 = vst.msk [vmem:[%s226 + $0x140] sm:$0xff] %vm1549, %v1431
      %1591 = vst.msk [vmem:[%s226 + $0x148] sm:$0xff] %vm1549, %v1436
      %1592 = vst.msk [vmem:[%s226 + $0x150] sm:$0xff] %vm1549, %v1441
      %1593 = vst.msk [vmem:[%s226 + $0x158] sm:$0xff] %vm1549, %v1446
      %1594 = vst.msk [vmem:[%s226 + $0x160] sm:$0xff] %vm1549, %v1451
      %1595 = vst.msk [vmem:[%s226 + $0x168] sm:$0xff] %vm1549, %v1456
      %1596 = vst.msk [vmem:[%s226 + $0x170] sm:$0xff] %vm1549, %v1461
      %1597 = vst.msk [vmem:[%s226 + $0x178] sm:$0xff] %vm1549, %v1466
      %1598 = vst.msk [vmem:[%s226 + $0x180] sm:$0xff] %vm1549, %v1471
      %1599 = vst.msk [vmem:[%s226 + $0x188] sm:$0xff] %vm1549, %v1476
      %1600 = vst.msk [vmem:[%s226 + $0x190] sm:$0xff] %vm1549, %v1481
      %1601 = vst.msk [vmem:[%s226 + $0x198] sm:$0xff] %vm1549, %v1486
      %1602 = vst.msk [vmem:[%s226 + $0x1a0] sm:$0xff] %vm1549, %v1491
      %1603 = vst.msk [vmem:[%s226 + $0x1a8] sm:$0xff] %vm1549, %v1496
      %1604 = vst.msk [vmem:[%s226 + $0x1b0] sm:$0xff] %vm1549, %v1501
      %1605 = vst.msk [vmem:[%s226 + $0x1b8] sm:$0xff] %vm1549, %v1506
      %1606 = vst.msk [vmem:[%s226 + $0x1c0] sm:$0xff] %vm1549, %v1511
      %1607 = vst.msk [vmem:[%s226 + $0x1c8] sm:$0xff] %vm1549, %v1516
      %1608 = vst.msk [vmem:[%s226 + $0x1d0] sm:$0xff] %vm1549, %v1521
      %1609 = vst.msk [vmem:[%s226 + $0x1d8] sm:$0xff] %vm1549, %v1526
      %1610 = vst.msk [vmem:[%s226 + $0x1e0] sm:$0xff] %vm1549, %v1531
      %1611 = vst.msk [vmem:[%s226 + $0x1e8] sm:$0xff] %vm1549, %v1536
      %1612 = vst.msk [vmem:[%s226 + $0x1f0] sm:$0xff] %vm1549, %v1541
      %1613 = vst.msk [vmem:[%s226 + $0x1f8] sm:$0xff] %vm1549, %v1546
      %s1614 = smul.u32 64, %s16
      %p1615 = scmp.lt.s32.totalorder %s1614, 255
      %s1616 = scalar_select %p1615, %s1614, 255
      %s1617 = smul.addr %s1616, 8
      %s1618 = scalar_lea.vmem %s5, %s1617
      // Predicated region
      $region41: #{tpu_custom_call.1} parent=39 // pred_check
        %p1619 = pneg %p144
      $region42: #{tpu_custom_call.1} parent=39 // pred_check_branch
        %1621 = sbr.rel (%p1619) target = $region44
      $region43: #{tpu_custom_call.1} parent=39 // pred_region
        %s1622 = smul.u32 64, %s16
      $region44: #{tpu_custom_call.1} parent=39 // pred_fallthru
        _
    $region40: #{tpu_custom_call.1} parent=5 // pred_fallthru
      _
    %p1623 = scmp.le.s32.totalorder 2, %s11
    // Predicated region
    $region45: #{tpu_custom_call.1} parent=5 // pred_check
      %p1624 = pneg %p1623
    $region46: #{tpu_custom_call.1} parent=5 // pred_check_branch
      %1626 = sbr.rel (%p1624) target = $region48
    $region47: #{tpu_custom_call.1} parent=5 // pred_region
      %s1627 = ssub.s32 %s11, 2
      // Predicated region
      $region49: #{tpu_custom_call.1} parent=47 // pred_check
        %p1628 = pneg %p150
      $region50: #{tpu_custom_call.1} parent=47 // pred_check_branch
        %1630 = sbr.rel (%p1628) target = $region52
      $region51: #{tpu_custom_call.1} parent=47 // pred_region
        %s1631 = smul.u32 64, %s17
        %p1632 = scmp.lt.s32.totalorder %s1631, 255
        %s1633 = scalar_select %p1632, %s1631, 255
        %s1634 = smul.addr %s1633, 8
        %s1635 = scalar_lea.vmem %s5, %s1634
      $region52: #{tpu_custom_call.1} parent=47 // pred_fallthru
        _
    $region48: #{tpu_custom_call.1} parent=5 // pred_fallthru
      _
  $region6: #{tpu_custom_call.1} parent=0 // loop_footer
    %s15 = sadd.s32 1, %s11
  $region7: #{tpu_custom_call.1} parent=0 // loop_footer_branch
    %10 = sbr.rel target = $region3
  $region8: #{tpu_custom_call.1} parent=0 // loop_exit
    _

</llo_original>
